<compile_context>
chip_gen: v7x
topology: tpu7x:2x2x1
jax: 0.10.0
libtpu: 0.0.40
codegen_flags: <defaults>
</compile_context>

<pallas_src>
import functools

import jax
import jax.numpy as jnp
from jax.experimental import pallas as pl
from jax.experimental.pallas import tpu as pltpu


# ---------------------------------------------------------------------------
# Kernel: one grid step == one (batch, seq-tile) of tile_s rows.
# Gathers token-embedding rows from HBM in double-buffered sub-tiles and
# applies (pos+token_type) add + LayerNorm per sub-tile.
# ---------------------------------------------------------------------------
def _token_embed_kernel(seq_len, tile_s, sub, eps,
                        ids_ref,      # SMEM (B*S,) int32   (scalar prefetch)
                        emb_hbm,      # ANY  (vocab, D)     token embedding table
                        pos_ref,      # VMEM (tile_s, D)    pos + token_type rows
                        g_ref,        # VMEM (1, D)         LayerNorm gamma
                        be_ref,       # VMEM (1, D)         LayerNorm beta
                        o_ref,        # VMEM (1, tile_s, D) output tile
                        gbuf,         # VMEM (2, sub, D)    double-buffered gather
                        sems):        # DMA semaphores (2,) one per slot
    b = pl.program_id(0)
    j = pl.program_id(1)
    base = b * seq_len + j * tile_s
    n_sub = tile_s // sub

    def issue(k, slot):
        # Issue `sub` row DMAs for sub-tile k into gbuf[slot]; all signal
        # sems[slot] (aggregate completion per sub-tile).
        row0 = k * sub
        for r in range(sub):                          # static, small unroll
            tok = ids_ref[base + row0 + r]            # SMEM scalar read
            pltpu.make_async_copy(emb_hbm.at[pl.ds(tok, 1)],     # (1, D) HBM row
                                  gbuf.at[slot, pl.ds(r, 1)],    # (1, D) VMEM row
                                  sems.at[slot]).start()

    def wait_all(slot):
        # Drain the `sub` equal-sized copies issued on sems[slot].
        for r in range(sub):
            pltpu.make_async_copy(emb_hbm.at[pl.ds(0, 1)],
                                  gbuf.at[slot, pl.ds(r, 1)],
                                  sems.at[slot]).wait()

    # Prime the pipeline with sub-tile 0.
    issue(0, 0)

    gamma = g_ref[...].astype(jnp.float32)
    beta = be_ref[...].astype(jnp.float32)

    @pl.loop(0, n_sub)
    def _(k):
        slot = k & 1

        # Prefetch next sub-tile's rows BEFORE waiting on the current one
        # (keeps scalar id reads ahead of the .wait()).
        @pl.when(k + 1 < n_sub)
        def _():
            issue(k + 1, 1 - slot)

        wait_all(slot)

        # TODO(synk): s_token_bias branch (embeddings[input_ids == 49410] += bias)
        # is omitted — s_token_bias is None unless set_s_token_bias() is called.

        row0 = pl.multiple_of(k * sub, sub)
        x = gbuf[slot].astype(jnp.float32)                       # (sub, D)
        x = x + pos_ref[pl.ds(row0, sub), :].astype(jnp.float32)

        # LayerNorm (biased variance, matching PyTorch), f32 throughout.
        mu = jnp.mean(x, axis=-1, keepdims=True)
        var = jnp.mean((x - mu) ** 2, axis=-1, keepdims=True)
        y = (x - mu) * jax.lax.rsqrt(var + eps)
        y = y * gamma + beta

        o_ref[0, pl.ds(row0, sub), :] = y.astype(o_ref.dtype)


# ---------------------------------------------------------------------------
# Parameter preparation (init-time, NOT per forward call):
# fold token_type weight[0] into the position table; reshape LN affine.
# ---------------------------------------------------------------------------
def prepare_params(raw):
    return {
        'emb': raw['emb'],                                    # (vocab, D), f32 or bf16
        'pos_tt': raw['pos'] + raw['tok_type'][0][None, :],   # (max_len, D)
        'gamma': raw['gamma'].reshape(1, -1),                 # (1, D)
        'beta': raw['beta'].reshape(1, -1),                   # (1, D)
    }


# ---------------------------------------------------------------------------
# Wrapper
# ---------------------------------------------------------------------------
def token_base_embedding(input_ids, params, *, tile_s=None, sub_tile=16, eps=1e-5):
    """input_ids: (B, S) int32; returns (B, S, D) embeddings (batch-first)."""
    B, S = input_ids.shape
    _, D = params['emb'].shape
    max_len = params['pos_tt'].shape[0]

    if tile_s is None:
        tile_s = min(S, 256)          # cap keeps VMEM comfortable even on v5e
    sub_tile = min(sub_tile, tile_s)

    assert S % tile_s == 0, "sequence length must be a multiple of the row tile"
    assert tile_s % sub_tile == 0 and sub_tile % 8 == 0, "sub-tile must be sublane-aligned"
    assert D % 128 == 0, "embedding dim must be lane-dense (multiple of 128)"
    assert S <= max_len, "sequence longer than position table"
    # NOTE: relies on input_ids in [0, vocab), as the PyTorch module does.

    ids_flat = input_ids.reshape(-1).astype(jnp.int32)        # -> SMEM prefetch
    kernel = functools.partial(_token_embed_kernel, S, tile_s, sub_tile, eps)

    def full_1d():
        return pl.BlockSpec((1, D), lambda b, j, ids: (0, 0))

    out = pl.pallas_call(
        kernel,
        out_shape=jax.ShapeDtypeStruct((B, S, D), params['emb'].dtype),
        grid_spec=pltpu.PrefetchScalarGridSpec(
            num_scalar_prefetch=1,
            grid=(B, S // tile_s),
            in_specs=[
                pl.BlockSpec(memory_space=pl.ANY),                       # emb table (HBM)
                pl.BlockSpec((tile_s, D), lambda b, j, ids: (j, 0)),     # pos + token_type
                full_1d(),                                               # LN gamma
                full_1d(),                                               # LN beta
            ],
            out_specs=pl.BlockSpec((1, tile_s, D), lambda b, j, ids: (b, j, 0)),
            scratch_shapes=[
                pltpu.VMEM((2, sub_tile, D), params['emb'].dtype),
                pltpu.SemaphoreType.DMA((2,)),
            ],
        ),
        compiler_params=pltpu.CompilerParams(
            dimension_semantics=("parallel", "parallel")),
    )(ids_flat, params['emb'], params['pos_tt'], params['gamma'], params['beta'])

    return out


# ---------------------------------------------------------------------------
# Pure-JAX reference (same math as the PyTorch module) for validation.
# ---------------------------------------------------------------------------
def reference_token_base_embedding(input_ids, raw, eps=1e-5):
    B, S = input_ids.shape
    emb = raw['emb'][input_ids]                                # (B, S, D)
    pos = raw['pos'][jnp.arange(S)]                            # (S, D)
    x = emb + pos[None, :, :] + raw['tok_type'][0][None, None, :]
    mu = x.mean(-1, keepdims=True)
    var = ((x - mu) ** 2).mean(-1, keepdims=True)
    return (x - mu) / jnp.sqrt(var + eps) * raw['gamma'] + raw['beta']


# ---------------------------------------------------------------------------
# Main: deterministic params + input, run kernel, check vs reference.
# ---------------------------------------------------------------------------
if __name__ == "__main__":
    # Small shapes consistent with the module (real model: vocab=49411, D=768,
    # max_len=512).  D is a multiple of 128 (lane-dense); S large enough to
    # exercise the double-buffered sub-tile gather pipeline and a multi-step
    # grid (2 steps -> splittable across v7x's two TensorCores).
    B, S, D = 2, 64, 256
    VOCAB, MAX_LEN = 512, 128

    key = jax.random.PRNGKey(0)
    k_ids, k_emb, k_pos, k_tt, k_g, k_b = jax.random.split(key, 6)

    raw = {
        'emb':      (0.02 * jax.random.normal(k_emb, (VOCAB, D))).astype(jnp.float32),
        'pos':      (0.02 * jax.random.normal(k_pos, (MAX_LEN, D))).astype(jnp.float32),
        'tok_type': (0.02 * jax.random.normal(k_tt, (2, D))).astype(jnp.float32),
        'gamma':    (1.0 + 0.05 * jax.random.normal(k_g, (D,))).astype(jnp.float32),
        'beta':     (0.05 * jax.random.normal(k_b, (D,))).astype(jnp.float32),
    }
    input_ids = jax.random.randint(k_ids, (B, S), 0, VOCAB, dtype=jnp.int32)

    params = prepare_params(raw)   # init-time fold of token_type[0] into pos

    out = jax.block_until_ready(token_base_embedding(input_ids, params))
    ref = jax.block_until_ready(reference_token_base_embedding(input_ids, raw))

    assert out.shape == (B, S, D)
    max_err = float(jnp.max(jnp.abs(out - ref)))
    assert max_err < 1e-4, f"max abs err {max_err}"

    print("KERNEL_OK")
</pallas_src>

<mosaic_0001>
module attributes {stable_mosaic.version = 11 : i64} {
  func.func @_token_embed_kernel(%arg0: i32, %arg1: i32, %arg2: memref<128xi32, #tpu.memory_space<smem>>, %arg3: memref<512x256xf32, #tpu.memory_space<any>>, %arg4: memref<64x256xf32, #tpu.memory_space<vmem>>, %arg5: memref<1x256xf32, #tpu.memory_space<vmem>>, %arg6: memref<1x256xf32, #tpu.memory_space<vmem>>, %arg7: memref<1x64x256xf32, #tpu.memory_space<vmem>>, %arg8: memref<2x16x256xf32, #tpu.memory_space<vmem>>, %arg9: memref<2x!tpu.dma_semaphore, #tpu.memory_space<semaphore_mem>>) attributes {dimension_semantics = [#tpu.dimension_semantics<parallel>, #tpu.dimension_semantics<parallel>], iteration_bounds = array<i64: 2, 1>, scalar_prefetch = 1 : i64, scratch_operands = 2 : i64, tpu.core_type = #tpu.core_type<tc>, window_params = [{}, {transform_indices = @transform_1, window_bounds = array<i64: 64, 256>}, {pipeline_mode = #tpu.pipeline_mode<synchronous>, transform_indices = @transform_2, window_bounds = array<i64: 1, 256>}, {pipeline_mode = #tpu.pipeline_mode<synchronous>, transform_indices = @transform_3, window_bounds = array<i64: 1, 256>}, {transform_indices = @transform_4, window_bounds = array<i64: 1, 64, 256>}]} {
    %c64_i32 = arith.constant 64 : i32
    %0 = arith.muli %arg0, %c64_i32 : i32
    %c64_i32_0 = arith.constant 64 : i32
    %1 = arith.muli %arg1, %c64_i32_0 : i32
    %2 = arith.addi %0, %1 : i32
    %c0_i32 = arith.constant 0 : i32
    %3 = arith.addi %2, %c0_i32 : i32
    %c0_i32_1 = arith.constant 0 : i32
    %4 = arith.addi %3, %c0_i32_1 : i32
    %5 = arith.index_cast %4 : i32 to index
    %6 = memref.load %arg2[%5] : memref<128xi32, #tpu.memory_space<smem>>
    %c0_i32_2 = arith.constant 0 : i32
    %c0_i32_3 = arith.constant 0 : i32
    %c0_i32_4 = arith.constant 0 : i32
    %7 = tpu.memref_slice %arg3[%6, %c0_i32_4] : memref<512x256xf32, #tpu.memory_space<any>> -> memref<1x256xf32, #tpu.memory_space<any>>
    %c0_i32_5 = arith.constant 0 : i32
    %c0_i32_6 = arith.constant 0 : i32
    %8 = tpu.memref_slice %arg8[%c0_i32_2, %c0_i32_5, %c0_i32_6] : memref<2x16x256xf32, #tpu.memory_space<vmem>> -> memref<1x1x256xf32, #tpu.memory_space<vmem>>
    %9 = tpu.memref_squeeze %8 : memref<1x1x256xf32, #tpu.memory_space<vmem>> -> memref<1x256xf32, #tpu.memory_space<vmem>>
    %10 = tpu.memref_slice %arg9[%c0_i32_3] : memref<2x!tpu.dma_semaphore, #tpu.memory_space<semaphore_mem>> -> memref<1x!tpu.dma_semaphore, #tpu.memory_space<semaphore_mem>>
    %11 = tpu.memref_squeeze %10 : memref<1x!tpu.dma_semaphore, #tpu.memory_space<semaphore_mem>> -> memref<!tpu.dma_semaphore, #tpu.memory_space<semaphore_mem>>
    tpu.enqueue_dma source(%7 : memref<1x256xf32, #tpu.memory_space<any>>) target(%9 : memref<1x256xf32, #tpu.memory_space<vmem>>) target_semaphore(%11 : memref<!tpu.dma_semaphore, #tpu.memory_space<semaphore_mem>>)
    %c0_i32_7 = arith.constant 0 : i32
    %12 = arith.addi %2, %c0_i32_7 : i32
    %c1_i32 = arith.constant 1 : i32
    %13 = arith.addi %12, %c1_i32 : i32
    %14 = arith.index_cast %13 : i32 to index
    %15 = memref.load %arg2[%14] : memref<128xi32, #tpu.memory_space<smem>>
    %c0_i32_8 = arith.constant 0 : i32
    %c0_i32_9 = arith.constant 0 : i32
    %c0_i32_10 = arith.constant 0 : i32
    %16 = tpu.memref_slice %arg3[%15, %c0_i32_10] : memref<512x256xf32, #tpu.memory_space<any>> -> memref<1x256xf32, #tpu.memory_space<any>>
    %c1_i32_11 = arith.constant 1 : i32
    %c0_i32_12 = arith.constant 0 : i32
    %17 = tpu.memref_slice %arg8[%c0_i32_8, %c1_i32_11, %c0_i32_12] : memref<2x16x256xf32, #tpu.memory_space<vmem>> -> memref<1x1x256xf32, #tpu.memory_space<vmem>>
    %18 = tpu.memref_squeeze %17 : memref<1x1x256xf32, #tpu.memory_space<vmem>> -> memref<1x256xf32, #tpu.memory_space<vmem>>
    %19 = tpu.memref_slice %arg9[%c0_i32_9] : memref<2x!tpu.dma_semaphore, #tpu.memory_space<semaphore_mem>> -> memref<1x!tpu.dma_semaphore, #tpu.memory_space<semaphore_mem>>
    %20 = tpu.memref_squeeze %19 : memref<1x!tpu.dma_semaphore, #tpu.memory_space<semaphore_mem>> -> memref<!tpu.dma_semaphore, #tpu.memory_space<semaphore_mem>>
    tpu.enqueue_dma source(%16 : memref<1x256xf32, #tpu.memory_space<any>>) target(%18 : memref<1x256xf32, #tpu.memory_space<vmem>>) target_semaphore(%20 : memref<!tpu.dma_semaphore, #tpu.memory_space<semaphore_mem>>)
    %c0_i32_13 = arith.constant 0 : i32
    %21 = arith.addi %2, %c0_i32_13 : i32
    %c2_i32 = arith.constant 2 : i32
    %22 = arith.addi %21, %c2_i32 : i32
    %23 = arith.index_cast %22 : i32 to index
    %24 = memref.load %arg2[%23] : memref<128xi32, #tpu.memory_space<smem>>
    %c0_i32_14 = arith.constant 0 : i32
    %c0_i32_15 = arith.constant 0 : i32
    %c0_i32_16 = arith.constant 0 : i32
    %25 = tpu.memref_slice %arg3[%24, %c0_i32_16] : memref<512x256xf32, #tpu.memory_space<any>> -> memref<1x256xf32, #tpu.memory_space<any>>
    %c2_i32_17 = arith.constant 2 : i32
    %c0_i32_18 = arith.constant 0 : i32
    %26 = tpu.memref_slice %arg8[%c0_i32_14, %c2_i32_17, %c0_i32_18] : memref<2x16x256xf32, #tpu.memory_space<vmem>> -> memref<1x1x256xf32, #tpu.memory_space<vmem>>
    %27 = tpu.memref_squeeze %26 : memref<1x1x256xf32, #tpu.memory_space<vmem>> -> memref<1x256xf32, #tpu.memory_space<vmem>>
    %28 = tpu.memref_slice %arg9[%c0_i32_15] : memref<2x!tpu.dma_semaphore, #tpu.memory_space<semaphore_mem>> -> memref<1x!tpu.dma_semaphore, #tpu.memory_space<semaphore_mem>>
    %29 = tpu.memref_squeeze %28 : memref<1x!tpu.dma_semaphore, #tpu.memory_space<semaphore_mem>> -> memref<!tpu.dma_semaphore, #tpu.memory_space<semaphore_mem>>
    tpu.enqueue_dma source(%25 : memref<1x256xf32, #tpu.memory_space<any>>) target(%27 : memref<1x256xf32, #tpu.memory_space<vmem>>) target_semaphore(%29 : memref<!tpu.dma_semaphore, #tpu.memory_space<semaphore_mem>>)
    %c0_i32_19 = arith.constant 0 : i32
    %30 = arith.addi %2, %c0_i32_19 : i32
    %c3_i32 = arith.constant 3 : i32
    %31 = arith.addi %30, %c3_i32 : i32
    %32 = arith.index_cast %31 : i32 to index
    %33 = memref.load %arg2[%32] : memref<128xi32, #tpu.memory_space<smem>>
    %c0_i32_20 = arith.constant 0 : i32
    %c0_i32_21 = arith.constant 0 : i32
    %c0_i32_22 = arith.constant 0 : i32
    %34 = tpu.memref_slice %arg3[%33, %c0_i32_22] : memref<512x256xf32, #tpu.memory_space<any>> -> memref<1x256xf32, #tpu.memory_space<any>>
    %c3_i32_23 = arith.constant 3 : i32
    %c0_i32_24 = arith.constant 0 : i32
    %35 = tpu.memref_slice %arg8[%c0_i32_20, %c3_i32_23, %c0_i32_24] : memref<2x16x256xf32, #tpu.memory_space<vmem>> -> memref<1x1x256xf32, #tpu.memory_space<vmem>>
    %36 = tpu.memref_squeeze %35 : memref<1x1x256xf32, #tpu.memory_space<vmem>> -> memref<1x256xf32, #tpu.memory_space<vmem>>
    %37 = tpu.memref_slice %arg9[%c0_i32_21] : memref<2x!tpu.dma_semaphore, #tpu.memory_space<semaphore_mem>> -> memref<1x!tpu.dma_semaphore, #tpu.memory_space<semaphore_mem>>
    %38 = tpu.memref_squeeze %37 : memref<1x!tpu.dma_semaphore, #tpu.memory_space<semaphore_mem>> -> memref<!tpu.dma_semaphore, #tpu.memory_space<semaphore_mem>>
    tpu.enqueue_dma source(%34 : memref<1x256xf32, #tpu.memory_space<any>>) target(%36 : memref<1x256xf32, #tpu.memory_space<vmem>>) target_semaphore(%38 : memref<!tpu.dma_semaphore, #tpu.memory_space<semaphore_mem>>)
    %c0_i32_25 = arith.constant 0 : i32
    %39 = arith.addi %2, %c0_i32_25 : i32
    %c4_i32 = arith.constant 4 : i32
    %40 = arith.addi %39, %c4_i32 : i32
    %41 = arith.index_cast %40 : i32 to index
    %42 = memref.load %arg2[%41] : memref<128xi32, #tpu.memory_space<smem>>
    %c0_i32_26 = arith.constant 0 : i32
    %c0_i32_27 = arith.constant 0 : i32
    %c0_i32_28 = arith.constant 0 : i32
    %43 = tpu.memref_slice %arg3[%42, %c0_i32_28] : memref<512x256xf32, #tpu.memory_space<any>> -> memref<1x256xf32, #tpu.memory_space<any>>
    %c4_i32_29 = arith.constant 4 : i32
    %c0_i32_30 = arith.constant 0 : i32
    %44 = tpu.memref_slice %arg8[%c0_i32_26, %c4_i32_29, %c0_i32_30] : memref<2x16x256xf32, #tpu.memory_space<vmem>> -> memref<1x1x256xf32, #tpu.memory_space<vmem>>
    %45 = tpu.memref_squeeze %44 : memref<1x1x256xf32, #tpu.memory_space<vmem>> -> memref<1x256xf32, #tpu.memory_space<vmem>>
    %46 = tpu.memref_slice %arg9[%c0_i32_27] : memref<2x!tpu.dma_semaphore, #tpu.memory_space<semaphore_mem>> -> memref<1x!tpu.dma_semaphore, #tpu.memory_space<semaphore_mem>>
    %47 = tpu.memref_squeeze %46 : memref<1x!tpu.dma_semaphore, #tpu.memory_space<semaphore_mem>> -> memref<!tpu.dma_semaphore, #tpu.memory_space<semaphore_mem>>
    tpu.enqueue_dma source(%43 : memref<1x256xf32, #tpu.memory_space<any>>) target(%45 : memref<1x256xf32, #tpu.memory_space<vmem>>) target_semaphore(%47 : memref<!tpu.dma_semaphore, #tpu.memory_space<semaphore_mem>>)
    %c0_i32_31 = arith.constant 0 : i32
    %48 = arith.addi %2, %c0_i32_31 : i32
    %c5_i32 = arith.constant 5 : i32
    %49 = arith.addi %48, %c5_i32 : i32
    %50 = arith.index_cast %49 : i32 to index
    %51 = memref.load %arg2[%50] : memref<128xi32, #tpu.memory_space<smem>>
    %c0_i32_32 = arith.constant 0 : i32
    %c0_i32_33 = arith.constant 0 : i32
    %c0_i32_34 = arith.constant 0 : i32
    %52 = tpu.memref_slice %arg3[%51, %c0_i32_34] : memref<512x256xf32, #tpu.memory_space<any>> -> memref<1x256xf32, #tpu.memory_space<any>>
    %c5_i32_35 = arith.constant 5 : i32
    %c0_i32_36 = arith.constant 0 : i32
    %53 = tpu.memref_slice %arg8[%c0_i32_32, %c5_i32_35, %c0_i32_36] : memref<2x16x256xf32, #tpu.memory_space<vmem>> -> memref<1x1x256xf32, #tpu.memory_space<vmem>>
    %54 = tpu.memref_squeeze %53 : memref<1x1x256xf32, #tpu.memory_space<vmem>> -> memref<1x256xf32, #tpu.memory_space<vmem>>
    %55 = tpu.memref_slice %arg9[%c0_i32_33] : memref<2x!tpu.dma_semaphore, #tpu.memory_space<semaphore_mem>> -> memref<1x!tpu.dma_semaphore, #tpu.memory_space<semaphore_mem>>
    %56 = tpu.memref_squeeze %55 : memref<1x!tpu.dma_semaphore, #tpu.memory_space<semaphore_mem>> -> memref<!tpu.dma_semaphore, #tpu.memory_space<semaphore_mem>>
    tpu.enqueue_dma source(%52 : memref<1x256xf32, #tpu.memory_space<any>>) target(%54 : memref<1x256xf32, #tpu.memory_space<vmem>>) target_semaphore(%56 : memref<!tpu.dma_semaphore, #tpu.memory_space<semaphore_mem>>)
    %c0_i32_37 = arith.constant 0 : i32
    %57 = arith.addi %2, %c0_i32_37 : i32
    %c6_i32 = arith.constant 6 : i32
    %58 = arith.addi %57, %c6_i32 : i32
    %59 = arith.index_cast %58 : i32 to index
    %60 = memref.load %arg2[%59] : memref<128xi32, #tpu.memory_space<smem>>
    %c0_i32_38 = arith.constant 0 : i32
    %c0_i32_39 = arith.constant 0 : i32
    %c0_i32_40 = arith.constant 0 : i32
    %61 = tpu.memref_slice %arg3[%60, %c0_i32_40] : memref<512x256xf32, #tpu.memory_space<any>> -> memref<1x256xf32, #tpu.memory_space<any>>
    %c6_i32_41 = arith.constant 6 : i32
    %c0_i32_42 = arith.constant 0 : i32
    %62 = tpu.memref_slice %arg8[%c0_i32_38, %c6_i32_41, %c0_i32_42] : memref<2x16x256xf32, #tpu.memory_space<vmem>> -> memref<1x1x256xf32, #tpu.memory_space<vmem>>
    %63 = tpu.memref_squeeze %62 : memref<1x1x256xf32, #tpu.memory_space<vmem>> -> memref<1x256xf32, #tpu.memory_space<vmem>>
    %64 = tpu.memref_slice %arg9[%c0_i32_39] : memref<2x!tpu.dma_semaphore, #tpu.memory_space<semaphore_mem>> -> memref<1x!tpu.dma_semaphore, #tpu.memory_space<semaphore_mem>>
    %65 = tpu.memref_squeeze %64 : memref<1x!tpu.dma_semaphore, #tpu.memory_space<semaphore_mem>> -> memref<!tpu.dma_semaphore, #tpu.memory_space<semaphore_mem>>
    tpu.enqueue_dma source(%61 : memref<1x256xf32, #tpu.memory_space<any>>) target(%63 : memref<1x256xf32, #tpu.memory_space<vmem>>) target_semaphore(%65 : memref<!tpu.dma_semaphore, #tpu.memory_space<semaphore_mem>>)
    %c0_i32_43 = arith.constant 0 : i32
    %66 = arith.addi %2, %c0_i32_43 : i32
    %c7_i32 = arith.constant 7 : i32
    %67 = arith.addi %66, %c7_i32 : i32
    %68 = arith.index_cast %67 : i32 to index
    %69 = memref.load %arg2[%68] : memref<128xi32, #tpu.memory_space<smem>>
    %c0_i32_44 = arith.constant 0 : i32
    %c0_i32_45 = arith.constant 0 : i32
    %c0_i32_46 = arith.constant 0 : i32
    %70 = tpu.memref_slice %arg3[%69, %c0_i32_46] : memref<512x256xf32, #tpu.memory_space<any>> -> memref<1x256xf32, #tpu.memory_space<any>>
    %c7_i32_47 = arith.constant 7 : i32
    %c0_i32_48 = arith.constant 0 : i32
    %71 = tpu.memref_slice %arg8[%c0_i32_44, %c7_i32_47, %c0_i32_48] : memref<2x16x256xf32, #tpu.memory_space<vmem>> -> memref<1x1x256xf32, #tpu.memory_space<vmem>>
    %72 = tpu.memref_squeeze %71 : memref<1x1x256xf32, #tpu.memory_space<vmem>> -> memref<1x256xf32, #tpu.memory_space<vmem>>
    %73 = tpu.memref_slice %arg9[%c0_i32_45] : memref<2x!tpu.dma_semaphore, #tpu.memory_space<semaphore_mem>> -> memref<1x!tpu.dma_semaphore, #tpu.memory_space<semaphore_mem>>
    %74 = tpu.memref_squeeze %73 : memref<1x!tpu.dma_semaphore, #tpu.memory_space<semaphore_mem>> -> memref<!tpu.dma_semaphore, #tpu.memory_space<semaphore_mem>>
    tpu.enqueue_dma source(%70 : memref<1x256xf32, #tpu.memory_space<any>>) target(%72 : memref<1x256xf32, #tpu.memory_space<vmem>>) target_semaphore(%74 : memref<!tpu.dma_semaphore, #tpu.memory_space<semaphore_mem>>)
    %c0_i32_49 = arith.constant 0 : i32
    %75 = arith.addi %2, %c0_i32_49 : i32
    %c8_i32 = arith.constant 8 : i32
    %76 = arith.addi %75, %c8_i32 : i32
    %77 = arith.index_cast %76 : i32 to index
    %78 = memref.load %arg2[%77] : memref<128xi32, #tpu.memory_space<smem>>
    %c0_i32_50 = arith.constant 0 : i32
    %c0_i32_51 = arith.constant 0 : i32
    %c0_i32_52 = arith.constant 0 : i32
    %79 = tpu.memref_slice %arg3[%78, %c0_i32_52] : memref<512x256xf32, #tpu.memory_space<any>> -> memref<1x256xf32, #tpu.memory_space<any>>
    %c8_i32_53 = arith.constant 8 : i32
    %c0_i32_54 = arith.constant 0 : i32
    %80 = tpu.memref_slice %arg8[%c0_i32_50, %c8_i32_53, %c0_i32_54] : memref<2x16x256xf32, #tpu.memory_space<vmem>> -> memref<1x1x256xf32, #tpu.memory_space<vmem>>
    %81 = tpu.memref_squeeze %80 : memref<1x1x256xf32, #tpu.memory_space<vmem>> -> memref<1x256xf32, #tpu.memory_space<vmem>>
    %82 = tpu.memref_slice %arg9[%c0_i32_51] : memref<2x!tpu.dma_semaphore, #tpu.memory_space<semaphore_mem>> -> memref<1x!tpu.dma_semaphore, #tpu.memory_space<semaphore_mem>>
    %83 = tpu.memref_squeeze %82 : memref<1x!tpu.dma_semaphore, #tpu.memory_space<semaphore_mem>> -> memref<!tpu.dma_semaphore, #tpu.memory_space<semaphore_mem>>
    tpu.enqueue_dma source(%79 : memref<1x256xf32, #tpu.memory_space<any>>) target(%81 : memref<1x256xf32, #tpu.memory_space<vmem>>) target_semaphore(%83 : memref<!tpu.dma_semaphore, #tpu.memory_space<semaphore_mem>>)
    %c0_i32_55 = arith.constant 0 : i32
    %84 = arith.addi %2, %c0_i32_55 : i32
    %c9_i32 = arith.constant 9 : i32
    %85 = arith.addi %84, %c9_i32 : i32
    %86 = arith.index_cast %85 : i32 to index
    %87 = memref.load %arg2[%86] : memref<128xi32, #tpu.memory_space<smem>>
    %c0_i32_56 = arith.constant 0 : i32
    %c0_i32_57 = arith.constant 0 : i32
    %c0_i32_58 = arith.constant 0 : i32
    %88 = tpu.memref_slice %arg3[%87, %c0_i32_58] : memref<512x256xf32, #tpu.memory_space<any>> -> memref<1x256xf32, #tpu.memory_space<any>>
    %c9_i32_59 = arith.constant 9 : i32
    %c0_i32_60 = arith.constant 0 : i32
    %89 = tpu.memref_slice %arg8[%c0_i32_56, %c9_i32_59, %c0_i32_60] : memref<2x16x256xf32, #tpu.memory_space<vmem>> -> memref<1x1x256xf32, #tpu.memory_space<vmem>>
    %90 = tpu.memref_squeeze %89 : memref<1x1x256xf32, #tpu.memory_space<vmem>> -> memref<1x256xf32, #tpu.memory_space<vmem>>
    %91 = tpu.memref_slice %arg9[%c0_i32_57] : memref<2x!tpu.dma_semaphore, #tpu.memory_space<semaphore_mem>> -> memref<1x!tpu.dma_semaphore, #tpu.memory_space<semaphore_mem>>
    %92 = tpu.memref_squeeze %91 : memref<1x!tpu.dma_semaphore, #tpu.memory_space<semaphore_mem>> -> memref<!tpu.dma_semaphore, #tpu.memory_space<semaphore_mem>>
    tpu.enqueue_dma source(%88 : memref<1x256xf32, #tpu.memory_space<any>>) target(%90 : memref<1x256xf32, #tpu.memory_space<vmem>>) target_semaphore(%92 : memref<!tpu.dma_semaphore, #tpu.memory_space<semaphore_mem>>)
    %c0_i32_61 = arith.constant 0 : i32
    %93 = arith.addi %2, %c0_i32_61 : i32
    %c10_i32 = arith.constant 10 : i32
    %94 = arith.addi %93, %c10_i32 : i32
    %95 = arith.index_cast %94 : i32 to index
    %96 = memref.load %arg2[%95] : memref<128xi32, #tpu.memory_space<smem>>
    %c0_i32_62 = arith.constant 0 : i32
    %c0_i32_63 = arith.constant 0 : i32
    %c0_i32_64 = arith.constant 0 : i32
    %97 = tpu.memref_slice %arg3[%96, %c0_i32_64] : memref<512x256xf32, #tpu.memory_space<any>> -> memref<1x256xf32, #tpu.memory_space<any>>
    %c10_i32_65 = arith.constant 10 : i32
    %c0_i32_66 = arith.constant 0 : i32
    %98 = tpu.memref_slice %arg8[%c0_i32_62, %c10_i32_65, %c0_i32_66] : memref<2x16x256xf32, #tpu.memory_space<vmem>> -> memref<1x1x256xf32, #tpu.memory_space<vmem>>
    %99 = tpu.memref_squeeze %98 : memref<1x1x256xf32, #tpu.memory_space<vmem>> -> memref<1x256xf32, #tpu.memory_space<vmem>>
    %100 = tpu.memref_slice %arg9[%c0_i32_63] : memref<2x!tpu.dma_semaphore, #tpu.memory_space<semaphore_mem>> -> memref<1x!tpu.dma_semaphore, #tpu.memory_space<semaphore_mem>>
    %101 = tpu.memref_squeeze %100 : memref<1x!tpu.dma_semaphore, #tpu.memory_space<semaphore_mem>> -> memref<!tpu.dma_semaphore, #tpu.memory_space<semaphore_mem>>
    tpu.enqueue_dma source(%97 : memref<1x256xf32, #tpu.memory_space<any>>) target(%99 : memref<1x256xf32, #tpu.memory_space<vmem>>) target_semaphore(%101 : memref<!tpu.dma_semaphore, #tpu.memory_space<semaphore_mem>>)
    %c0_i32_67 = arith.constant 0 : i32
    %102 = arith.addi %2, %c0_i32_67 : i32
    %c11_i32 = arith.constant 11 : i32
    %103 = arith.addi %102, %c11_i32 : i32
    %104 = arith.index_cast %103 : i32 to index
    %105 = memref.load %arg2[%104] : memref<128xi32, #tpu.memory_space<smem>>
    %c0_i32_68 = arith.constant 0 : i32
    %c0_i32_69 = arith.constant 0 : i32
    %c0_i32_70 = arith.constant 0 : i32
    %106 = tpu.memref_slice %arg3[%105, %c0_i32_70] : memref<512x256xf32, #tpu.memory_space<any>> -> memref<1x256xf32, #tpu.memory_space<any>>
    %c11_i32_71 = arith.constant 11 : i32
    %c0_i32_72 = arith.constant 0 : i32
    %107 = tpu.memref_slice %arg8[%c0_i32_68, %c11_i32_71, %c0_i32_72] : memref<2x16x256xf32, #tpu.memory_space<vmem>> -> memref<1x1x256xf32, #tpu.memory_space<vmem>>
    %108 = tpu.memref_squeeze %107 : memref<1x1x256xf32, #tpu.memory_space<vmem>> -> memref<1x256xf32, #tpu.memory_space<vmem>>
    %109 = tpu.memref_slice %arg9[%c0_i32_69] : memref<2x!tpu.dma_semaphore, #tpu.memory_space<semaphore_mem>> -> memref<1x!tpu.dma_semaphore, #tpu.memory_space<semaphore_mem>>
    %110 = tpu.memref_squeeze %109 : memref<1x!tpu.dma_semaphore, #tpu.memory_space<semaphore_mem>> -> memref<!tpu.dma_semaphore, #tpu.memory_space<semaphore_mem>>
    tpu.enqueue_dma source(%106 : memref<1x256xf32, #tpu.memory_space<any>>) target(%108 : memref<1x256xf32, #tpu.memory_space<vmem>>) target_semaphore(%110 : memref<!tpu.dma_semaphore, #tpu.memory_space<semaphore_mem>>)
    %c0_i32_73 = arith.constant 0 : i32
    %111 = arith.addi %2, %c0_i32_73 : i32
    %c12_i32 = arith.constant 12 : i32
    %112 = arith.addi %111, %c12_i32 : i32
    %113 = arith.index_cast %112 : i32 to index
    %114 = memref.load %arg2[%113] : memref<128xi32, #tpu.memory_space<smem>>
    %c0_i32_74 = arith.constant 0 : i32
    %c0_i32_75 = arith.constant 0 : i32
    %c0_i32_76 = arith.constant 0 : i32
    %115 = tpu.memref_slice %arg3[%114, %c0_i32_76] : memref<512x256xf32, #tpu.memory_space<any>> -> memref<1x256xf32, #tpu.memory_space<any>>
    %c12_i32_77 = arith.constant 12 : i32
    %c0_i32_78 = arith.constant 0 : i32
    %116 = tpu.memref_slice %arg8[%c0_i32_74, %c12_i32_77, %c0_i32_78] : memref<2x16x256xf32, #tpu.memory_space<vmem>> -> memref<1x1x256xf32, #tpu.memory_space<vmem>>
    %117 = tpu.memref_squeeze %116 : memref<1x1x256xf32, #tpu.memory_space<vmem>> -> memref<1x256xf32, #tpu.memory_space<vmem>>
    %118 = tpu.memref_slice %arg9[%c0_i32_75] : memref<2x!tpu.dma_semaphore, #tpu.memory_space<semaphore_mem>> -> memref<1x!tpu.dma_semaphore, #tpu.memory_space<semaphore_mem>>
    %119 = tpu.memref_squeeze %118 : memref<1x!tpu.dma_semaphore, #tpu.memory_space<semaphore_mem>> -> memref<!tpu.dma_semaphore, #tpu.memory_space<semaphore_mem>>
    tpu.enqueue_dma source(%115 : memref<1x256xf32, #tpu.memory_space<any>>) target(%117 : memref<1x256xf32, #tpu.memory_space<vmem>>) target_semaphore(%119 : memref<!tpu.dma_semaphore, #tpu.memory_space<semaphore_mem>>)
    %c0_i32_79 = arith.constant 0 : i32
    %120 = arith.addi %2, %c0_i32_79 : i32
    %c13_i32 = arith.constant 13 : i32
    %121 = arith.addi %120, %c13_i32 : i32
    %122 = arith.index_cast %121 : i32 to index
    %123 = memref.load %arg2[%122] : memref<128xi32, #tpu.memory_space<smem>>
    %c0_i32_80 = arith.constant 0 : i32
    %c0_i32_81 = arith.constant 0 : i32
    %c0_i32_82 = arith.constant 0 : i32
    %124 = tpu.memref_slice %arg3[%123, %c0_i32_82] : memref<512x256xf32, #tpu.memory_space<any>> -> memref<1x256xf32, #tpu.memory_space<any>>
    %c13_i32_83 = arith.constant 13 : i32
    %c0_i32_84 = arith.constant 0 : i32
    %125 = tpu.memref_slice %arg8[%c0_i32_80, %c13_i32_83, %c0_i32_84] : memref<2x16x256xf32, #tpu.memory_space<vmem>> -> memref<1x1x256xf32, #tpu.memory_space<vmem>>
    %126 = tpu.memref_squeeze %125 : memref<1x1x256xf32, #tpu.memory_space<vmem>> -> memref<1x256xf32, #tpu.memory_space<vmem>>
    %127 = tpu.memref_slice %arg9[%c0_i32_81] : memref<2x!tpu.dma_semaphore, #tpu.memory_space<semaphore_mem>> -> memref<1x!tpu.dma_semaphore, #tpu.memory_space<semaphore_mem>>
    %128 = tpu.memref_squeeze %127 : memref<1x!tpu.dma_semaphore, #tpu.memory_space<semaphore_mem>> -> memref<!tpu.dma_semaphore, #tpu.memory_space<semaphore_mem>>
    tpu.enqueue_dma source(%124 : memref<1x256xf32, #tpu.memory_space<any>>) target(%126 : memref<1x256xf32, #tpu.memory_space<vmem>>) target_semaphore(%128 : memref<!tpu.dma_semaphore, #tpu.memory_space<semaphore_mem>>)
    %c0_i32_85 = arith.constant 0 : i32
    %129 = arith.addi %2, %c0_i32_85 : i32
    %c14_i32 = arith.constant 14 : i32
    %130 = arith.addi %129, %c14_i32 : i32
    %131 = arith.index_cast %130 : i32 to index
    %132 = memref.load %arg2[%131] : memref<128xi32, #tpu.memory_space<smem>>
    %c0_i32_86 = arith.constant 0 : i32
    %c0_i32_87 = arith.constant 0 : i32
    %c0_i32_88 = arith.constant 0 : i32
    %133 = tpu.memref_slice %arg3[%132, %c0_i32_88] : memref<512x256xf32, #tpu.memory_space<any>> -> memref<1x256xf32, #tpu.memory_space<any>>
    %c14_i32_89 = arith.constant 14 : i32
    %c0_i32_90 = arith.constant 0 : i32
    %134 = tpu.memref_slice %arg8[%c0_i32_86, %c14_i32_89, %c0_i32_90] : memref<2x16x256xf32, #tpu.memory_space<vmem>> -> memref<1x1x256xf32, #tpu.memory_space<vmem>>
    %135 = tpu.memref_squeeze %134 : memref<1x1x256xf32, #tpu.memory_space<vmem>> -> memref<1x256xf32, #tpu.memory_space<vmem>>
    %136 = tpu.memref_slice %arg9[%c0_i32_87] : memref<2x!tpu.dma_semaphore, #tpu.memory_space<semaphore_mem>> -> memref<1x!tpu.dma_semaphore, #tpu.memory_space<semaphore_mem>>
    %137 = tpu.memref_squeeze %136 : memref<1x!tpu.dma_semaphore, #tpu.memory_space<semaphore_mem>> -> memref<!tpu.dma_semaphore, #tpu.memory_space<semaphore_mem>>
    tpu.enqueue_dma source(%133 : memref<1x256xf32, #tpu.memory_space<any>>) target(%135 : memref<1x256xf32, #tpu.memory_space<vmem>>) target_semaphore(%137 : memref<!tpu.dma_semaphore, #tpu.memory_space<semaphore_mem>>)
    %c0_i32_91 = arith.constant 0 : i32
    %138 = arith.addi %2, %c0_i32_91 : i32
    %c15_i32 = arith.constant 15 : i32
    %139 = arith.addi %138, %c15_i32 : i32
    %140 = arith.index_cast %139 : i32 to index
    %141 = memref.load %arg2[%140] : memref<128xi32, #tpu.memory_space<smem>>
    %c0_i32_92 = arith.constant 0 : i32
    %c0_i32_93 = arith.constant 0 : i32
    %c0_i32_94 = arith.constant 0 : i32
    %142 = tpu.memref_slice %arg3[%141, %c0_i32_94] : memref<512x256xf32, #tpu.memory_space<any>> -> memref<1x256xf32, #tpu.memory_space<any>>
    %c15_i32_95 = arith.constant 15 : i32
    %c0_i32_96 = arith.constant 0 : i32
    %143 = tpu.memref_slice %arg8[%c0_i32_92, %c15_i32_95, %c0_i32_96] : memref<2x16x256xf32, #tpu.memory_space<vmem>> -> memref<1x1x256xf32, #tpu.memory_space<vmem>>
    %144 = tpu.memref_squeeze %143 : memref<1x1x256xf32, #tpu.memory_space<vmem>> -> memref<1x256xf32, #tpu.memory_space<vmem>>
    %145 = tpu.memref_slice %arg9[%c0_i32_93] : memref<2x!tpu.dma_semaphore, #tpu.memory_space<semaphore_mem>> -> memref<1x!tpu.dma_semaphore, #tpu.memory_space<semaphore_mem>>
    %146 = tpu.memref_squeeze %145 : memref<1x!tpu.dma_semaphore, #tpu.memory_space<semaphore_mem>> -> memref<!tpu.dma_semaphore, #tpu.memory_space<semaphore_mem>>
    tpu.enqueue_dma source(%142 : memref<1x256xf32, #tpu.memory_space<any>>) target(%144 : memref<1x256xf32, #tpu.memory_space<vmem>>) target_semaphore(%146 : memref<!tpu.dma_semaphore, #tpu.memory_space<semaphore_mem>>)
    %c0 = arith.constant 0 : index
    %c0_97 = arith.constant 0 : index
    %147 = vector.load %arg5[%c0, %c0_97] : memref<1x256xf32, #tpu.memory_space<vmem>>, vector<1x256xf32>
    %c0_98 = arith.constant 0 : index
    %c0_99 = arith.constant 0 : index
    %148 = vector.load %arg6[%c0_98, %c0_99] : memref<1x256xf32, #tpu.memory_space<vmem>>, vector<1x256xf32>
    %c0_i32_100 = arith.constant 0 : i32
    %c4_i32_101 = arith.constant 4 : i32
    %149 = arith.addi %c0_i32_100, %c4_i32_101 : i32
    %c1_i32_102 = arith.constant 1 : i32
    scf.for %arg10 = %c0_i32_100 to %149 step %c1_i32_102  : i32 {
      %c1_i32_104 = arith.constant 1 : i32
      %150 = arith.muli %arg10, %c1_i32_104 : i32
      %c0_i32_105 = arith.constant 0 : i32
      %151 = arith.addi %c0_i32_105, %150 : i32
      %c1_i32_106 = arith.constant 1 : i32
      %152 = arith.andi %151, %c1_i32_106 : i32
      %c1_i32_107 = arith.constant 1 : i32
      %153 = arith.addi %151, %c1_i32_107 : i32
      %c4_i32_108 = arith.constant 4 : i32
      %154 = arith.cmpi slt, %153, %c4_i32_108 : i32
      %155 = arith.extui %154 : i1 to i32
      %c0_i32_109 = arith.constant 0 : i32
      %156 = arith.cmpi ne, %155, %c0_i32_109 : i32
      scf.if %156 {
        %c1_i32_183 = arith.constant 1 : i32
        %271 = arith.addi %151, %c1_i32_183 : i32
        %c1_i32_184 = arith.constant 1 : i32
        %272 = arith.subi %c1_i32_184, %152 : i32
        %c16_i32_185 = arith.constant 16 : i32
        %273 = arith.muli %271, %c16_i32_185 : i32
        %274 = arith.addi %2, %273 : i32
        %c0_i32_186 = arith.constant 0 : i32
        %275 = arith.addi %274, %c0_i32_186 : i32
        %276 = arith.index_cast %275 : i32 to index
        %277 = memref.load %arg2[%276] : memref<128xi32, #tpu.memory_space<smem>>
        %c0_i32_187 = arith.constant 0 : i32
        %278 = tpu.memref_slice %arg3[%277, %c0_i32_187] : memref<512x256xf32, #tpu.memory_space<any>> -> memref<1x256xf32, #tpu.memory_space<any>>
        %c0_i32_188 = arith.constant 0 : i32
        %c0_i32_189 = arith.constant 0 : i32
        %279 = tpu.memref_slice %arg8[%272, %c0_i32_188, %c0_i32_189] : memref<2x16x256xf32, #tpu.memory_space<vmem>> -> memref<1x1x256xf32, #tpu.memory_space<vmem>>
        %280 = tpu.memref_squeeze %279 : memref<1x1x256xf32, #tpu.memory_space<vmem>> -> memref<1x256xf32, #tpu.memory_space<vmem>>
        %281 = tpu.memref_slice %arg9[%272] : memref<2x!tpu.dma_semaphore, #tpu.memory_space<semaphore_mem>> -> memref<1x!tpu.dma_semaphore, #tpu.memory_space<semaphore_mem>>
        %282 = tpu.memref_squeeze %281 : memref<1x!tpu.dma_semaphore, #tpu.memory_space<semaphore_mem>> -> memref<!tpu.dma_semaphore, #tpu.memory_space<semaphore_mem>>
        tpu.enqueue_dma source(%278 : memref<1x256xf32, #tpu.memory_space<any>>) target(%280 : memref<1x256xf32, #tpu.memory_space<vmem>>) target_semaphore(%282 : memref<!tpu.dma_semaphore, #tpu.memory_space<semaphore_mem>>)
        %283 = arith.addi %2, %273 : i32
        %c1_i32_190 = arith.constant 1 : i32
        %284 = arith.addi %283, %c1_i32_190 : i32
        %285 = arith.index_cast %284 : i32 to index
        %286 = memref.load %arg2[%285] : memref<128xi32, #tpu.memory_space<smem>>
        %c0_i32_191 = arith.constant 0 : i32
        %287 = tpu.memref_slice %arg3[%286, %c0_i32_191] : memref<512x256xf32, #tpu.memory_space<any>> -> memref<1x256xf32, #tpu.memory_space<any>>
        %c1_i32_192 = arith.constant 1 : i32
        %c0_i32_193 = arith.constant 0 : i32
        %288 = tpu.memref_slice %arg8[%272, %c1_i32_192, %c0_i32_193] : memref<2x16x256xf32, #tpu.memory_space<vmem>> -> memref<1x1x256xf32, #tpu.memory_space<vmem>>
        %289 = tpu.memref_squeeze %288 : memref<1x1x256xf32, #tpu.memory_space<vmem>> -> memref<1x256xf32, #tpu.memory_space<vmem>>
        %290 = tpu.memref_slice %arg9[%272] : memref<2x!tpu.dma_semaphore, #tpu.memory_space<semaphore_mem>> -> memref<1x!tpu.dma_semaphore, #tpu.memory_space<semaphore_mem>>
        %291 = tpu.memref_squeeze %290 : memref<1x!tpu.dma_semaphore, #tpu.memory_space<semaphore_mem>> -> memref<!tpu.dma_semaphore, #tpu.memory_space<semaphore_mem>>
        tpu.enqueue_dma source(%287 : memref<1x256xf32, #tpu.memory_space<any>>) target(%289 : memref<1x256xf32, #tpu.memory_space<vmem>>) target_semaphore(%291 : memref<!tpu.dma_semaphore, #tpu.memory_space<semaphore_mem>>)
        %292 = arith.addi %2, %273 : i32
        %c2_i32_194 = arith.constant 2 : i32
        %293 = arith.addi %292, %c2_i32_194 : i32
        %294 = arith.index_cast %293 : i32 to index
        %295 = memref.load %arg2[%294] : memref<128xi32, #tpu.memory_space<smem>>
        %c0_i32_195 = arith.constant 0 : i32
        %296 = tpu.memref_slice %arg3[%295, %c0_i32_195] : memref<512x256xf32, #tpu.memory_space<any>> -> memref<1x256xf32, #tpu.memory_space<any>>
        %c2_i32_196 = arith.constant 2 : i32
        %c0_i32_197 = arith.constant 0 : i32
        %297 = tpu.memref_slice %arg8[%272, %c2_i32_196, %c0_i32_197] : memref<2x16x256xf32, #tpu.memory_space<vmem>> -> memref<1x1x256xf32, #tpu.memory_space<vmem>>
        %298 = tpu.memref_squeeze %297 : memref<1x1x256xf32, #tpu.memory_space<vmem>> -> memref<1x256xf32, #tpu.memory_space<vmem>>
        %299 = tpu.memref_slice %arg9[%272] : memref<2x!tpu.dma_semaphore, #tpu.memory_space<semaphore_mem>> -> memref<1x!tpu.dma_semaphore, #tpu.memory_space<semaphore_mem>>
        %300 = tpu.memref_squeeze %299 : memref<1x!tpu.dma_semaphore, #tpu.memory_space<semaphore_mem>> -> memref<!tpu.dma_semaphore, #tpu.memory_space<semaphore_mem>>
        tpu.enqueue_dma source(%296 : memref<1x256xf32, #tpu.memory_space<any>>) target(%298 : memref<1x256xf32, #tpu.memory_space<vmem>>) target_semaphore(%300 : memref<!tpu.dma_semaphore, #tpu.memory_space<semaphore_mem>>)
        %301 = arith.addi %2, %273 : i32
        %c3_i32_198 = arith.constant 3 : i32
        %302 = arith.addi %301, %c3_i32_198 : i32
        %303 = arith.index_cast %302 : i32 to index
        %304 = memref.load %arg2[%303] : memref<128xi32, #tpu.memory_space<smem>>
        %c0_i32_199 = arith.constant 0 : i32
        %305 = tpu.memref_slice %arg3[%304, %c0_i32_199] : memref<512x256xf32, #tpu.memory_space<any>> -> memref<1x256xf32, #tpu.memory_space<any>>
        %c3_i32_200 = arith.constant 3 : i32
        %c0_i32_201 = arith.constant 0 : i32
        %306 = tpu.memref_slice %arg8[%272, %c3_i32_200, %c0_i32_201] : memref<2x16x256xf32, #tpu.memory_space<vmem>> -> memref<1x1x256xf32, #tpu.memory_space<vmem>>
        %307 = tpu.memref_squeeze %306 : memref<1x1x256xf32, #tpu.memory_space<vmem>> -> memref<1x256xf32, #tpu.memory_space<vmem>>
        %308 = tpu.memref_slice %arg9[%272] : memref<2x!tpu.dma_semaphore, #tpu.memory_space<semaphore_mem>> -> memref<1x!tpu.dma_semaphore, #tpu.memory_space<semaphore_mem>>
        %309 = tpu.memref_squeeze %308 : memref<1x!tpu.dma_semaphore, #tpu.memory_space<semaphore_mem>> -> memref<!tpu.dma_semaphore, #tpu.memory_space<semaphore_mem>>
        tpu.enqueue_dma source(%305 : memref<1x256xf32, #tpu.memory_space<any>>) target(%307 : memref<1x256xf32, #tpu.memory_space<vmem>>) target_semaphore(%309 : memref<!tpu.dma_semaphore, #tpu.memory_space<semaphore_mem>>)
        %310 = arith.addi %2, %273 : i32
        %c4_i32_202 = arith.constant 4 : i32
        %311 = arith.addi %310, %c4_i32_202 : i32
        %312 = arith.index_cast %311 : i32 to index
        %313 = memref.load %arg2[%312] : memref<128xi32, #tpu.memory_space<smem>>
        %c0_i32_203 = arith.constant 0 : i32
        %314 = tpu.memref_slice %arg3[%313, %c0_i32_203] : memref<512x256xf32, #tpu.memory_space<any>> -> memref<1x256xf32, #tpu.memory_space<any>>
        %c4_i32_204 = arith.constant 4 : i32
        %c0_i32_205 = arith.constant 0 : i32
        %315 = tpu.memref_slice %arg8[%272, %c4_i32_204, %c0_i32_205] : memref<2x16x256xf32, #tpu.memory_space<vmem>> -> memref<1x1x256xf32, #tpu.memory_space<vmem>>
        %316 = tpu.memref_squeeze %315 : memref<1x1x256xf32, #tpu.memory_space<vmem>> -> memref<1x256xf32, #tpu.memory_space<vmem>>
        %317 = tpu.memref_slice %arg9[%272] : memref<2x!tpu.dma_semaphore, #tpu.memory_space<semaphore_mem>> -> memref<1x!tpu.dma_semaphore, #tpu.memory_space<semaphore_mem>>
        %318 = tpu.memref_squeeze %317 : memref<1x!tpu.dma_semaphore, #tpu.memory_space<semaphore_mem>> -> memref<!tpu.dma_semaphore, #tpu.memory_space<semaphore_mem>>
        tpu.enqueue_dma source(%314 : memref<1x256xf32, #tpu.memory_space<any>>) target(%316 : memref<1x256xf32, #tpu.memory_space<vmem>>) target_semaphore(%318 : memref<!tpu.dma_semaphore, #tpu.memory_space<semaphore_mem>>)
        %319 = arith.addi %2, %273 : i32
        %c5_i32_206 = arith.constant 5 : i32
        %320 = arith.addi %319, %c5_i32_206 : i32
        %321 = arith.index_cast %320 : i32 to index
        %322 = memref.load %arg2[%321] : memref<128xi32, #tpu.memory_space<smem>>
        %c0_i32_207 = arith.constant 0 : i32
        %323 = tpu.memref_slice %arg3[%322, %c0_i32_207] : memref<512x256xf32, #tpu.memory_space<any>> -> memref<1x256xf32, #tpu.memory_space<any>>
        %c5_i32_208 = arith.constant 5 : i32
        %c0_i32_209 = arith.constant 0 : i32
        %324 = tpu.memref_slice %arg8[%272, %c5_i32_208, %c0_i32_209] : memref<2x16x256xf32, #tpu.memory_space<vmem>> -> memref<1x1x256xf32, #tpu.memory_space<vmem>>
        %325 = tpu.memref_squeeze %324 : memref<1x1x256xf32, #tpu.memory_space<vmem>> -> memref<1x256xf32, #tpu.memory_space<vmem>>
        %326 = tpu.memref_slice %arg9[%272] : memref<2x!tpu.dma_semaphore, #tpu.memory_space<semaphore_mem>> -> memref<1x!tpu.dma_semaphore, #tpu.memory_space<semaphore_mem>>
        %327 = tpu.memref_squeeze %326 : memref<1x!tpu.dma_semaphore, #tpu.memory_space<semaphore_mem>> -> memref<!tpu.dma_semaphore, #tpu.memory_space<semaphore_mem>>
        tpu.enqueue_dma source(%323 : memref<1x256xf32, #tpu.memory_space<any>>) target(%325 : memref<1x256xf32, #tpu.memory_space<vmem>>) target_semaphore(%327 : memref<!tpu.dma_semaphore, #tpu.memory_space<semaphore_mem>>)
        %328 = arith.addi %2, %273 : i32
        %c6_i32_210 = arith.constant 6 : i32
        %329 = arith.addi %328, %c6_i32_210 : i32
        %330 = arith.index_cast %329 : i32 to index
        %331 = memref.load %arg2[%330] : memref<128xi32, #tpu.memory_space<smem>>
        %c0_i32_211 = arith.constant 0 : i32
        %332 = tpu.memref_slice %arg3[%331, %c0_i32_211] : memref<512x256xf32, #tpu.memory_space<any>> -> memref<1x256xf32, #tpu.memory_space<any>>
        %c6_i32_212 = arith.constant 6 : i32
        %c0_i32_213 = arith.constant 0 : i32
        %333 = tpu.memref_slice %arg8[%272, %c6_i32_212, %c0_i32_213] : memref<2x16x256xf32, #tpu.memory_space<vmem>> -> memref<1x1x256xf32, #tpu.memory_space<vmem>>
        %334 = tpu.memref_squeeze %333 : memref<1x1x256xf32, #tpu.memory_space<vmem>> -> memref<1x256xf32, #tpu.memory_space<vmem>>
        %335 = tpu.memref_slice %arg9[%272] : memref<2x!tpu.dma_semaphore, #tpu.memory_space<semaphore_mem>> -> memref<1x!tpu.dma_semaphore, #tpu.memory_space<semaphore_mem>>
        %336 = tpu.memref_squeeze %335 : memref<1x!tpu.dma_semaphore, #tpu.memory_space<semaphore_mem>> -> memref<!tpu.dma_semaphore, #tpu.memory_space<semaphore_mem>>
        tpu.enqueue_dma source(%332 : memref<1x256xf32, #tpu.memory_space<any>>) target(%334 : memref<1x256xf32, #tpu.memory_space<vmem>>) target_semaphore(%336 : memref<!tpu.dma_semaphore, #tpu.memory_space<semaphore_mem>>)
        %337 = arith.addi %2, %273 : i32
        %c7_i32_214 = arith.constant 7 : i32
        %338 = arith.addi %337, %c7_i32_214 : i32
        %339 = arith.index_cast %338 : i32 to index
        %340 = memref.load %arg2[%339] : memref<128xi32, #tpu.memory_space<smem>>
        %c0_i32_215 = arith.constant 0 : i32
        %341 = tpu.memref_slice %arg3[%340, %c0_i32_215] : memref<512x256xf32, #tpu.memory_space<any>> -> memref<1x256xf32, #tpu.memory_space<any>>
        %c7_i32_216 = arith.constant 7 : i32
        %c0_i32_217 = arith.constant 0 : i32
        %342 = tpu.memref_slice %arg8[%272, %c7_i32_216, %c0_i32_217] : memref<2x16x256xf32, #tpu.memory_space<vmem>> -> memref<1x1x256xf32, #tpu.memory_space<vmem>>
        %343 = tpu.memref_squeeze %342 : memref<1x1x256xf32, #tpu.memory_space<vmem>> -> memref<1x256xf32, #tpu.memory_space<vmem>>
        %344 = tpu.memref_slice %arg9[%272] : memref<2x!tpu.dma_semaphore, #tpu.memory_space<semaphore_mem>> -> memref<1x!tpu.dma_semaphore, #tpu.memory_space<semaphore_mem>>
        %345 = tpu.memref_squeeze %344 : memref<1x!tpu.dma_semaphore, #tpu.memory_space<semaphore_mem>> -> memref<!tpu.dma_semaphore, #tpu.memory_space<semaphore_mem>>
        tpu.enqueue_dma source(%341 : memref<1x256xf32, #tpu.memory_space<any>>) target(%343 : memref<1x256xf32, #tpu.memory_space<vmem>>) target_semaphore(%345 : memref<!tpu.dma_semaphore, #tpu.memory_space<semaphore_mem>>)
        %346 = arith.addi %2, %273 : i32
        %c8_i32_218 = arith.constant 8 : i32
        %347 = arith.addi %346, %c8_i32_218 : i32
        %348 = arith.index_cast %347 : i32 to index
        %349 = memref.load %arg2[%348] : memref<128xi32, #tpu.memory_space<smem>>
        %c0_i32_219 = arith.constant 0 : i32
        %350 = tpu.memref_slice %arg3[%349, %c0_i32_219] : memref<512x256xf32, #tpu.memory_space<any>> -> memref<1x256xf32, #tpu.memory_space<any>>
        %c8_i32_220 = arith.constant 8 : i32
        %c0_i32_221 = arith.constant 0 : i32
        %351 = tpu.memref_slice %arg8[%272, %c8_i32_220, %c0_i32_221] : memref<2x16x256xf32, #tpu.memory_space<vmem>> -> memref<1x1x256xf32, #tpu.memory_space<vmem>>
        %352 = tpu.memref_squeeze %351 : memref<1x1x256xf32, #tpu.memory_space<vmem>> -> memref<1x256xf32, #tpu.memory_space<vmem>>
        %353 = tpu.memref_slice %arg9[%272] : memref<2x!tpu.dma_semaphore, #tpu.memory_space<semaphore_mem>> -> memref<1x!tpu.dma_semaphore, #tpu.memory_space<semaphore_mem>>
        %354 = tpu.memref_squeeze %353 : memref<1x!tpu.dma_semaphore, #tpu.memory_space<semaphore_mem>> -> memref<!tpu.dma_semaphore, #tpu.memory_space<semaphore_mem>>
        tpu.enqueue_dma source(%350 : memref<1x256xf32, #tpu.memory_space<any>>) target(%352 : memref<1x256xf32, #tpu.memory_space<vmem>>) target_semaphore(%354 : memref<!tpu.dma_semaphore, #tpu.memory_space<semaphore_mem>>)
        %355 = arith.addi %2, %273 : i32
        %c9_i32_222 = arith.constant 9 : i32
        %356 = arith.addi %355, %c9_i32_222 : i32
        %357 = arith.index_cast %356 : i32 to index
        %358 = memref.load %arg2[%357] : memref<128xi32, #tpu.memory_space<smem>>
        %c0_i32_223 = arith.constant 0 : i32
        %359 = tpu.memref_slice %arg3[%358, %c0_i32_223] : memref<512x256xf32, #tpu.memory_space<any>> -> memref<1x256xf32, #tpu.memory_space<any>>
        %c9_i32_224 = arith.constant 9 : i32
        %c0_i32_225 = arith.constant 0 : i32
        %360 = tpu.memref_slice %arg8[%272, %c9_i32_224, %c0_i32_225] : memref<2x16x256xf32, #tpu.memory_space<vmem>> -> memref<1x1x256xf32, #tpu.memory_space<vmem>>
        %361 = tpu.memref_squeeze %360 : memref<1x1x256xf32, #tpu.memory_space<vmem>> -> memref<1x256xf32, #tpu.memory_space<vmem>>
        %362 = tpu.memref_slice %arg9[%272] : memref<2x!tpu.dma_semaphore, #tpu.memory_space<semaphore_mem>> -> memref<1x!tpu.dma_semaphore, #tpu.memory_space<semaphore_mem>>
        %363 = tpu.memref_squeeze %362 : memref<1x!tpu.dma_semaphore, #tpu.memory_space<semaphore_mem>> -> memref<!tpu.dma_semaphore, #tpu.memory_space<semaphore_mem>>
        tpu.enqueue_dma source(%359 : memref<1x256xf32, #tpu.memory_space<any>>) target(%361 : memref<1x256xf32, #tpu.memory_space<vmem>>) target_semaphore(%363 : memref<!tpu.dma_semaphore, #tpu.memory_space<semaphore_mem>>)
        %364 = arith.addi %2, %273 : i32
        %c10_i32_226 = arith.constant 10 : i32
        %365 = arith.addi %364, %c10_i32_226 : i32
        %366 = arith.index_cast %365 : i32 to index
        %367 = memref.load %arg2[%366] : memref<128xi32, #tpu.memory_space<smem>>
        %c0_i32_227 = arith.constant 0 : i32
        %368 = tpu.memref_slice %arg3[%367, %c0_i32_227] : memref<512x256xf32, #tpu.memory_space<any>> -> memref<1x256xf32, #tpu.memory_space<any>>
        %c10_i32_228 = arith.constant 10 : i32
        %c0_i32_229 = arith.constant 0 : i32
        %369 = tpu.memref_slice %arg8[%272, %c10_i32_228, %c0_i32_229] : memref<2x16x256xf32, #tpu.memory_space<vmem>> -> memref<1x1x256xf32, #tpu.memory_space<vmem>>
        %370 = tpu.memref_squeeze %369 : memref<1x1x256xf32, #tpu.memory_space<vmem>> -> memref<1x256xf32, #tpu.memory_space<vmem>>
        %371 = tpu.memref_slice %arg9[%272] : memref<2x!tpu.dma_semaphore, #tpu.memory_space<semaphore_mem>> -> memref<1x!tpu.dma_semaphore, #tpu.memory_space<semaphore_mem>>
        %372 = tpu.memref_squeeze %371 : memref<1x!tpu.dma_semaphore, #tpu.memory_space<semaphore_mem>> -> memref<!tpu.dma_semaphore, #tpu.memory_space<semaphore_mem>>
        tpu.enqueue_dma source(%368 : memref<1x256xf32, #tpu.memory_space<any>>) target(%370 : memref<1x256xf32, #tpu.memory_space<vmem>>) target_semaphore(%372 : memref<!tpu.dma_semaphore, #tpu.memory_space<semaphore_mem>>)
        %373 = arith.addi %2, %273 : i32
        %c11_i32_230 = arith.constant 11 : i32
        %374 = arith.addi %373, %c11_i32_230 : i32
        %375 = arith.index_cast %374 : i32 to index
        %376 = memref.load %arg2[%375] : memref<128xi32, #tpu.memory_space<smem>>
        %c0_i32_231 = arith.constant 0 : i32
        %377 = tpu.memref_slice %arg3[%376, %c0_i32_231] : memref<512x256xf32, #tpu.memory_space<any>> -> memref<1x256xf32, #tpu.memory_space<any>>
        %c11_i32_232 = arith.constant 11 : i32
        %c0_i32_233 = arith.constant 0 : i32
        %378 = tpu.memref_slice %arg8[%272, %c11_i32_232, %c0_i32_233] : memref<2x16x256xf32, #tpu.memory_space<vmem>> -> memref<1x1x256xf32, #tpu.memory_space<vmem>>
        %379 = tpu.memref_squeeze %378 : memref<1x1x256xf32, #tpu.memory_space<vmem>> -> memref<1x256xf32, #tpu.memory_space<vmem>>
        %380 = tpu.memref_slice %arg9[%272] : memref<2x!tpu.dma_semaphore, #tpu.memory_space<semaphore_mem>> -> memref<1x!tpu.dma_semaphore, #tpu.memory_space<semaphore_mem>>
        %381 = tpu.memref_squeeze %380 : memref<1x!tpu.dma_semaphore, #tpu.memory_space<semaphore_mem>> -> memref<!tpu.dma_semaphore, #tpu.memory_space<semaphore_mem>>
        tpu.enqueue_dma source(%377 : memref<1x256xf32, #tpu.memory_space<any>>) target(%379 : memref<1x256xf32, #tpu.memory_space<vmem>>) target_semaphore(%381 : memref<!tpu.dma_semaphore, #tpu.memory_space<semaphore_mem>>)
        %382 = arith.addi %2, %273 : i32
        %c12_i32_234 = arith.constant 12 : i32
        %383 = arith.addi %382, %c12_i32_234 : i32
        %384 = arith.index_cast %383 : i32 to index
        %385 = memref.load %arg2[%384] : memref<128xi32, #tpu.memory_space<smem>>
        %c0_i32_235 = arith.constant 0 : i32
        %386 = tpu.memref_slice %arg3[%385, %c0_i32_235] : memref<512x256xf32, #tpu.memory_space<any>> -> memref<1x256xf32, #tpu.memory_space<any>>
        %c12_i32_236 = arith.constant 12 : i32
        %c0_i32_237 = arith.constant 0 : i32
        %387 = tpu.memref_slice %arg8[%272, %c12_i32_236, %c0_i32_237] : memref<2x16x256xf32, #tpu.memory_space<vmem>> -> memref<1x1x256xf32, #tpu.memory_space<vmem>>
        %388 = tpu.memref_squeeze %387 : memref<1x1x256xf32, #tpu.memory_space<vmem>> -> memref<1x256xf32, #tpu.memory_space<vmem>>
        %389 = tpu.memref_slice %arg9[%272] : memref<2x!tpu.dma_semaphore, #tpu.memory_space<semaphore_mem>> -> memref<1x!tpu.dma_semaphore, #tpu.memory_space<semaphore_mem>>
        %390 = tpu.memref_squeeze %389 : memref<1x!tpu.dma_semaphore, #tpu.memory_space<semaphore_mem>> -> memref<!tpu.dma_semaphore, #tpu.memory_space<semaphore_mem>>
        tpu.enqueue_dma source(%386 : memref<1x256xf32, #tpu.memory_space<any>>) target(%388 : memref<1x256xf32, #tpu.memory_space<vmem>>) target_semaphore(%390 : memref<!tpu.dma_semaphore, #tpu.memory_space<semaphore_mem>>)
        %391 = arith.addi %2, %273 : i32
        %c13_i32_238 = arith.constant 13 : i32
        %392 = arith.addi %391, %c13_i32_238 : i32
        %393 = arith.index_cast %392 : i32 to index
        %394 = memref.load %arg2[%393] : memref<128xi32, #tpu.memory_space<smem>>
        %c0_i32_239 = arith.constant 0 : i32
        %395 = tpu.memref_slice %arg3[%394, %c0_i32_239] : memref<512x256xf32, #tpu.memory_space<any>> -> memref<1x256xf32, #tpu.memory_space<any>>
        %c13_i32_240 = arith.constant 13 : i32
        %c0_i32_241 = arith.constant 0 : i32
        %396 = tpu.memref_slice %arg8[%272, %c13_i32_240, %c0_i32_241] : memref<2x16x256xf32, #tpu.memory_space<vmem>> -> memref<1x1x256xf32, #tpu.memory_space<vmem>>
        %397 = tpu.memref_squeeze %396 : memref<1x1x256xf32, #tpu.memory_space<vmem>> -> memref<1x256xf32, #tpu.memory_space<vmem>>
        %398 = tpu.memref_slice %arg9[%272] : memref<2x!tpu.dma_semaphore, #tpu.memory_space<semaphore_mem>> -> memref<1x!tpu.dma_semaphore, #tpu.memory_space<semaphore_mem>>
        %399 = tpu.memref_squeeze %398 : memref<1x!tpu.dma_semaphore, #tpu.memory_space<semaphore_mem>> -> memref<!tpu.dma_semaphore, #tpu.memory_space<semaphore_mem>>
        tpu.enqueue_dma source(%395 : memref<1x256xf32, #tpu.memory_space<any>>) target(%397 : memref<1x256xf32, #tpu.memory_space<vmem>>) target_semaphore(%399 : memref<!tpu.dma_semaphore, #tpu.memory_space<semaphore_mem>>)
        %400 = arith.addi %2, %273 : i32
        %c14_i32_242 = arith.constant 14 : i32
        %401 = arith.addi %400, %c14_i32_242 : i32
        %402 = arith.index_cast %401 : i32 to index
        %403 = memref.load %arg2[%402] : memref<128xi32, #tpu.memory_space<smem>>
        %c0_i32_243 = arith.constant 0 : i32
        %404 = tpu.memref_slice %arg3[%403, %c0_i32_243] : memref<512x256xf32, #tpu.memory_space<any>> -> memref<1x256xf32, #tpu.memory_space<any>>
        %c14_i32_244 = arith.constant 14 : i32
        %c0_i32_245 = arith.constant 0 : i32
        %405 = tpu.memref_slice %arg8[%272, %c14_i32_244, %c0_i32_245] : memref<2x16x256xf32, #tpu.memory_space<vmem>> -> memref<1x1x256xf32, #tpu.memory_space<vmem>>
        %406 = tpu.memref_squeeze %405 : memref<1x1x256xf32, #tpu.memory_space<vmem>> -> memref<1x256xf32, #tpu.memory_space<vmem>>
        %407 = tpu.memref_slice %arg9[%272] : memref<2x!tpu.dma_semaphore, #tpu.memory_space<semaphore_mem>> -> memref<1x!tpu.dma_semaphore, #tpu.memory_space<semaphore_mem>>
        %408 = tpu.memref_squeeze %407 : memref<1x!tpu.dma_semaphore, #tpu.memory_space<semaphore_mem>> -> memref<!tpu.dma_semaphore, #tpu.memory_space<semaphore_mem>>
        tpu.enqueue_dma source(%404 : memref<1x256xf32, #tpu.memory_space<any>>) target(%406 : memref<1x256xf32, #tpu.memory_space<vmem>>) target_semaphore(%408 : memref<!tpu.dma_semaphore, #tpu.memory_space<semaphore_mem>>)
        %409 = arith.addi %2, %273 : i32
        %c15_i32_246 = arith.constant 15 : i32
        %410 = arith.addi %409, %c15_i32_246 : i32
        %411 = arith.index_cast %410 : i32 to index
        %412 = memref.load %arg2[%411] : memref<128xi32, #tpu.memory_space<smem>>
        %c0_i32_247 = arith.constant 0 : i32
        %413 = tpu.memref_slice %arg3[%412, %c0_i32_247] : memref<512x256xf32, #tpu.memory_space<any>> -> memref<1x256xf32, #tpu.memory_space<any>>
        %c15_i32_248 = arith.constant 15 : i32
        %c0_i32_249 = arith.constant 0 : i32
        %414 = tpu.memref_slice %arg8[%272, %c15_i32_248, %c0_i32_249] : memref<2x16x256xf32, #tpu.memory_space<vmem>> -> memref<1x1x256xf32, #tpu.memory_space<vmem>>
        %415 = tpu.memref_squeeze %414 : memref<1x1x256xf32, #tpu.memory_space<vmem>> -> memref<1x256xf32, #tpu.memory_space<vmem>>
        %416 = tpu.memref_slice %arg9[%272] : memref<2x!tpu.dma_semaphore, #tpu.memory_space<semaphore_mem>> -> memref<1x!tpu.dma_semaphore, #tpu.memory_space<semaphore_mem>>
        %417 = tpu.memref_squeeze %416 : memref<1x!tpu.dma_semaphore, #tpu.memory_space<semaphore_mem>> -> memref<!tpu.dma_semaphore, #tpu.memory_space<semaphore_mem>>
        tpu.enqueue_dma source(%413 : memref<1x256xf32, #tpu.memory_space<any>>) target(%415 : memref<1x256xf32, #tpu.memory_space<vmem>>) target_semaphore(%417 : memref<!tpu.dma_semaphore, #tpu.memory_space<semaphore_mem>>)
      } else {
      }
      %c0_i32_110 = arith.constant 0 : i32
      %c0_i32_111 = arith.constant 0 : i32
      %157 = tpu.memref_slice %arg3[%c0_i32_110, %c0_i32_111] : memref<512x256xf32, #tpu.memory_space<any>> -> memref<1x256xf32, #tpu.memory_space<any>>
      %c0_i32_112 = arith.constant 0 : i32
      %c0_i32_113 = arith.constant 0 : i32
      %158 = tpu.memref_slice %arg8[%152, %c0_i32_112, %c0_i32_113] : memref<2x16x256xf32, #tpu.memory_space<vmem>> -> memref<1x1x256xf32, #tpu.memory_space<vmem>>
      %159 = tpu.memref_squeeze %158 : memref<1x1x256xf32, #tpu.memory_space<vmem>> -> memref<1x256xf32, #tpu.memory_space<vmem>>
      %160 = tpu.memref_slice %arg9[%152] : memref<2x!tpu.dma_semaphore, #tpu.memory_space<semaphore_mem>> -> memref<1x!tpu.dma_semaphore, #tpu.memory_space<semaphore_mem>>
      %161 = tpu.memref_squeeze %160 : memref<1x!tpu.dma_semaphore, #tpu.memory_space<semaphore_mem>> -> memref<!tpu.dma_semaphore, #tpu.memory_space<semaphore_mem>>
      tpu.wait_dma2 semaphore(%161 : memref<!tpu.dma_semaphore, #tpu.memory_space<semaphore_mem>>) src(%157 : memref<1x256xf32, #tpu.memory_space<any>>) dst(%159 : memref<1x256xf32, #tpu.memory_space<vmem>>)
      %c0_i32_114 = arith.constant 0 : i32
      %c0_i32_115 = arith.constant 0 : i32
      %162 = tpu.memref_slice %arg3[%c0_i32_114, %c0_i32_115] : memref<512x256xf32, #tpu.memory_space<any>> -> memref<1x256xf32, #tpu.memory_space<any>>
      %c1_i32_116 = arith.constant 1 : i32
      %c0_i32_117 = arith.constant 0 : i32
      %163 = tpu.memref_slice %arg8[%152, %c1_i32_116, %c0_i32_117] : memref<2x16x256xf32, #tpu.memory_space<vmem>> -> memref<1x1x256xf32, #tpu.memory_space<vmem>>
      %164 = tpu.memref_squeeze %163 : memref<1x1x256xf32, #tpu.memory_space<vmem>> -> memref<1x256xf32, #tpu.memory_space<vmem>>
      %165 = tpu.memref_slice %arg9[%152] : memref<2x!tpu.dma_semaphore, #tpu.memory_space<semaphore_mem>> -> memref<1x!tpu.dma_semaphore, #tpu.memory_space<semaphore_mem>>
      %166 = tpu.memref_squeeze %165 : memref<1x!tpu.dma_semaphore, #tpu.memory_space<semaphore_mem>> -> memref<!tpu.dma_semaphore, #tpu.memory_space<semaphore_mem>>
      tpu.wait_dma2 semaphore(%166 : memref<!tpu.dma_semaphore, #tpu.memory_space<semaphore_mem>>) src(%162 : memref<1x256xf32, #tpu.memory_space<any>>) dst(%164 : memref<1x256xf32, #tpu.memory_space<vmem>>)
      %c0_i32_118 = arith.constant 0 : i32
      %c0_i32_119 = arith.constant 0 : i32
      %167 = tpu.memref_slice %arg3[%c0_i32_118, %c0_i32_119] : memref<512x256xf32, #tpu.memory_space<any>> -> memref<1x256xf32, #tpu.memory_space<any>>
      %c2_i32_120 = arith.constant 2 : i32
      %c0_i32_121 = arith.constant 0 : i32
      %168 = tpu.memref_slice %arg8[%152, %c2_i32_120, %c0_i32_121] : memref<2x16x256xf32, #tpu.memory_space<vmem>> -> memref<1x1x256xf32, #tpu.memory_space<vmem>>
      %169 = tpu.memref_squeeze %168 : memref<1x1x256xf32, #tpu.memory_space<vmem>> -> memref<1x256xf32, #tpu.memory_space<vmem>>
      %170 = tpu.memref_slice %arg9[%152] : memref<2x!tpu.dma_semaphore, #tpu.memory_space<semaphore_mem>> -> memref<1x!tpu.dma_semaphore, #tpu.memory_space<semaphore_mem>>
      %171 = tpu.memref_squeeze %170 : memref<1x!tpu.dma_semaphore, #tpu.memory_space<semaphore_mem>> -> memref<!tpu.dma_semaphore, #tpu.memory_space<semaphore_mem>>
      tpu.wait_dma2 semaphore(%171 : memref<!tpu.dma_semaphore, #tpu.memory_space<semaphore_mem>>) src(%167 : memref<1x256xf32, #tpu.memory_space<any>>) dst(%169 : memref<1x256xf32, #tpu.memory_space<vmem>>)
      %c0_i32_122 = arith.constant 0 : i32
      %c0_i32_123 = arith.constant 0 : i32
      %172 = tpu.memref_slice %arg3[%c0_i32_122, %c0_i32_123] : memref<512x256xf32, #tpu.memory_space<any>> -> memref<1x256xf32, #tpu.memory_space<any>>
      %c3_i32_124 = arith.constant 3 : i32
      %c0_i32_125 = arith.constant 0 : i32
      %173 = tpu.memref_slice %arg8[%152, %c3_i32_124, %c0_i32_125] : memref<2x16x256xf32, #tpu.memory_space<vmem>> -> memref<1x1x256xf32, #tpu.memory_space<vmem>>
      %174 = tpu.memref_squeeze %173 : memref<1x1x256xf32, #tpu.memory_space<vmem>> -> memref<1x256xf32, #tpu.memory_space<vmem>>
      %175 = tpu.memref_slice %arg9[%152] : memref<2x!tpu.dma_semaphore, #tpu.memory_space<semaphore_mem>> -> memref<1x!tpu.dma_semaphore, #tpu.memory_space<semaphore_mem>>
      %176 = tpu.memref_squeeze %175 : memref<1x!tpu.dma_semaphore, #tpu.memory_space<semaphore_mem>> -> memref<!tpu.dma_semaphore, #tpu.memory_space<semaphore_mem>>
      tpu.wait_dma2 semaphore(%176 : memref<!tpu.dma_semaphore, #tpu.memory_space<semaphore_mem>>) src(%172 : memref<1x256xf32, #tpu.memory_space<any>>) dst(%174 : memref<1x256xf32, #tpu.memory_space<vmem>>)
      %c0_i32_126 = arith.constant 0 : i32
      %c0_i32_127 = arith.constant 0 : i32
      %177 = tpu.memref_slice %arg3[%c0_i32_126, %c0_i32_127] : memref<512x256xf32, #tpu.memory_space<any>> -> memref<1x256xf32, #tpu.memory_space<any>>
      %c4_i32_128 = arith.constant 4 : i32
      %c0_i32_129 = arith.constant 0 : i32
      %178 = tpu.memref_slice %arg8[%152, %c4_i32_128, %c0_i32_129] : memref<2x16x256xf32, #tpu.memory_space<vmem>> -> memref<1x1x256xf32, #tpu.memory_space<vmem>>
      %179 = tpu.memref_squeeze %178 : memref<1x1x256xf32, #tpu.memory_space<vmem>> -> memref<1x256xf32, #tpu.memory_space<vmem>>
      %180 = tpu.memref_slice %arg9[%152] : memref<2x!tpu.dma_semaphore, #tpu.memory_space<semaphore_mem>> -> memref<1x!tpu.dma_semaphore, #tpu.memory_space<semaphore_mem>>
      %181 = tpu.memref_squeeze %180 : memref<1x!tpu.dma_semaphore, #tpu.memory_space<semaphore_mem>> -> memref<!tpu.dma_semaphore, #tpu.memory_space<semaphore_mem>>
      tpu.wait_dma2 semaphore(%181 : memref<!tpu.dma_semaphore, #tpu.memory_space<semaphore_mem>>) src(%177 : memref<1x256xf32, #tpu.memory_space<any>>) dst(%179 : memref<1x256xf32, #tpu.memory_space<vmem>>)
      %c0_i32_130 = arith.constant 0 : i32
      %c0_i32_131 = arith.constant 0 : i32
      %182 = tpu.memref_slice %arg3[%c0_i32_130, %c0_i32_131] : memref<512x256xf32, #tpu.memory_space<any>> -> memref<1x256xf32, #tpu.memory_space<any>>
      %c5_i32_132 = arith.constant 5 : i32
      %c0_i32_133 = arith.constant 0 : i32
      %183 = tpu.memref_slice %arg8[%152, %c5_i32_132, %c0_i32_133] : memref<2x16x256xf32, #tpu.memory_space<vmem>> -> memref<1x1x256xf32, #tpu.memory_space<vmem>>
      %184 = tpu.memref_squeeze %183 : memref<1x1x256xf32, #tpu.memory_space<vmem>> -> memref<1x256xf32, #tpu.memory_space<vmem>>
      %185 = tpu.memref_slice %arg9[%152] : memref<2x!tpu.dma_semaphore, #tpu.memory_space<semaphore_mem>> -> memref<1x!tpu.dma_semaphore, #tpu.memory_space<semaphore_mem>>
      %186 = tpu.memref_squeeze %185 : memref<1x!tpu.dma_semaphore, #tpu.memory_space<semaphore_mem>> -> memref<!tpu.dma_semaphore, #tpu.memory_space<semaphore_mem>>
      tpu.wait_dma2 semaphore(%186 : memref<!tpu.dma_semaphore, #tpu.memory_space<semaphore_mem>>) src(%182 : memref<1x256xf32, #tpu.memory_space<any>>) dst(%184 : memref<1x256xf32, #tpu.memory_space<vmem>>)
      %c0_i32_134 = arith.constant 0 : i32
      %c0_i32_135 = arith.constant 0 : i32
      %187 = tpu.memref_slice %arg3[%c0_i32_134, %c0_i32_135] : memref<512x256xf32, #tpu.memory_space<any>> -> memref<1x256xf32, #tpu.memory_space<any>>
      %c6_i32_136 = arith.constant 6 : i32
      %c0_i32_137 = arith.constant 0 : i32
      %188 = tpu.memref_slice %arg8[%152, %c6_i32_136, %c0_i32_137] : memref<2x16x256xf32, #tpu.memory_space<vmem>> -> memref<1x1x256xf32, #tpu.memory_space<vmem>>
      %189 = tpu.memref_squeeze %188 : memref<1x1x256xf32, #tpu.memory_space<vmem>> -> memref<1x256xf32, #tpu.memory_space<vmem>>
      %190 = tpu.memref_slice %arg9[%152] : memref<2x!tpu.dma_semaphore, #tpu.memory_space<semaphore_mem>> -> memref<1x!tpu.dma_semaphore, #tpu.memory_space<semaphore_mem>>
      %191 = tpu.memref_squeeze %190 : memref<1x!tpu.dma_semaphore, #tpu.memory_space<semaphore_mem>> -> memref<!tpu.dma_semaphore, #tpu.memory_space<semaphore_mem>>
      tpu.wait_dma2 semaphore(%191 : memref<!tpu.dma_semaphore, #tpu.memory_space<semaphore_mem>>) src(%187 : memref<1x256xf32, #tpu.memory_space<any>>) dst(%189 : memref<1x256xf32, #tpu.memory_space<vmem>>)
      %c0_i32_138 = arith.constant 0 : i32
      %c0_i32_139 = arith.constant 0 : i32
      %192 = tpu.memref_slice %arg3[%c0_i32_138, %c0_i32_139] : memref<512x256xf32, #tpu.memory_space<any>> -> memref<1x256xf32, #tpu.memory_space<any>>
      %c7_i32_140 = arith.constant 7 : i32
      %c0_i32_141 = arith.constant 0 : i32
      %193 = tpu.memref_slice %arg8[%152, %c7_i32_140, %c0_i32_141] : memref<2x16x256xf32, #tpu.memory_space<vmem>> -> memref<1x1x256xf32, #tpu.memory_space<vmem>>
      %194 = tpu.memref_squeeze %193 : memref<1x1x256xf32, #tpu.memory_space<vmem>> -> memref<1x256xf32, #tpu.memory_space<vmem>>
      %195 = tpu.memref_slice %arg9[%152] : memref<2x!tpu.dma_semaphore, #tpu.memory_space<semaphore_mem>> -> memref<1x!tpu.dma_semaphore, #tpu.memory_space<semaphore_mem>>
      %196 = tpu.memref_squeeze %195 : memref<1x!tpu.dma_semaphore, #tpu.memory_space<semaphore_mem>> -> memref<!tpu.dma_semaphore, #tpu.memory_space<semaphore_mem>>
      tpu.wait_dma2 semaphore(%196 : memref<!tpu.dma_semaphore, #tpu.memory_space<semaphore_mem>>) src(%192 : memref<1x256xf32, #tpu.memory_space<any>>) dst(%194 : memref<1x256xf32, #tpu.memory_space<vmem>>)
      %c0_i32_142 = arith.constant 0 : i32
      %c0_i32_143 = arith.constant 0 : i32
      %197 = tpu.memref_slice %arg3[%c0_i32_142, %c0_i32_143] : memref<512x256xf32, #tpu.memory_space<any>> -> memref<1x256xf32, #tpu.memory_space<any>>
      %c8_i32_144 = arith.constant 8 : i32
      %c0_i32_145 = arith.constant 0 : i32
      %198 = tpu.memref_slice %arg8[%152, %c8_i32_144, %c0_i32_145] : memref<2x16x256xf32, #tpu.memory_space<vmem>> -> memref<1x1x256xf32, #tpu.memory_space<vmem>>
      %199 = tpu.memref_squeeze %198 : memref<1x1x256xf32, #tpu.memory_space<vmem>> -> memref<1x256xf32, #tpu.memory_space<vmem>>
      %200 = tpu.memref_slice %arg9[%152] : memref<2x!tpu.dma_semaphore, #tpu.memory_space<semaphore_mem>> -> memref<1x!tpu.dma_semaphore, #tpu.memory_space<semaphore_mem>>
      %201 = tpu.memref_squeeze %200 : memref<1x!tpu.dma_semaphore, #tpu.memory_space<semaphore_mem>> -> memref<!tpu.dma_semaphore, #tpu.memory_space<semaphore_mem>>
      tpu.wait_dma2 semaphore(%201 : memref<!tpu.dma_semaphore, #tpu.memory_space<semaphore_mem>>) src(%197 : memref<1x256xf32, #tpu.memory_space<any>>) dst(%199 : memref<1x256xf32, #tpu.memory_space<vmem>>)
      %c0_i32_146 = arith.constant 0 : i32
      %c0_i32_147 = arith.constant 0 : i32
      %202 = tpu.memref_slice %arg3[%c0_i32_146, %c0_i32_147] : memref<512x256xf32, #tpu.memory_space<any>> -> memref<1x256xf32, #tpu.memory_space<any>>
      %c9_i32_148 = arith.constant 9 : i32
      %c0_i32_149 = arith.constant 0 : i32
      %203 = tpu.memref_slice %arg8[%152, %c9_i32_148, %c0_i32_149] : memref<2x16x256xf32, #tpu.memory_space<vmem>> -> memref<1x1x256xf32, #tpu.memory_space<vmem>>
      %204 = tpu.memref_squeeze %203 : memref<1x1x256xf32, #tpu.memory_space<vmem>> -> memref<1x256xf32, #tpu.memory_space<vmem>>
      %205 = tpu.memref_slice %arg9[%152] : memref<2x!tpu.dma_semaphore, #tpu.memory_space<semaphore_mem>> -> memref<1x!tpu.dma_semaphore, #tpu.memory_space<semaphore_mem>>
      %206 = tpu.memref_squeeze %205 : memref<1x!tpu.dma_semaphore, #tpu.memory_space<semaphore_mem>> -> memref<!tpu.dma_semaphore, #tpu.memory_space<semaphore_mem>>
      tpu.wait_dma2 semaphore(%206 : memref<!tpu.dma_semaphore, #tpu.memory_space<semaphore_mem>>) src(%202 : memref<1x256xf32, #tpu.memory_space<any>>) dst(%204 : memref<1x256xf32, #tpu.memory_space<vmem>>)
      %c0_i32_150 = arith.constant 0 : i32
      %c0_i32_151 = arith.constant 0 : i32
      %207 = tpu.memref_slice %arg3[%c0_i32_150, %c0_i32_151] : memref<512x256xf32, #tpu.memory_space<any>> -> memref<1x256xf32, #tpu.memory_space<any>>
      %c10_i32_152 = arith.constant 10 : i32
      %c0_i32_153 = arith.constant 0 : i32
      %208 = tpu.memref_slice %arg8[%152, %c10_i32_152, %c0_i32_153] : memref<2x16x256xf32, #tpu.memory_space<vmem>> -> memref<1x1x256xf32, #tpu.memory_space<vmem>>
      %209 = tpu.memref_squeeze %208 : memref<1x1x256xf32, #tpu.memory_space<vmem>> -> memref<1x256xf32, #tpu.memory_space<vmem>>
      %210 = tpu.memref_slice %arg9[%152] : memref<2x!tpu.dma_semaphore, #tpu.memory_space<semaphore_mem>> -> memref<1x!tpu.dma_semaphore, #tpu.memory_space<semaphore_mem>>
      %211 = tpu.memref_squeeze %210 : memref<1x!tpu.dma_semaphore, #tpu.memory_space<semaphore_mem>> -> memref<!tpu.dma_semaphore, #tpu.memory_space<semaphore_mem>>
      tpu.wait_dma2 semaphore(%211 : memref<!tpu.dma_semaphore, #tpu.memory_space<semaphore_mem>>) src(%207 : memref<1x256xf32, #tpu.memory_space<any>>) dst(%209 : memref<1x256xf32, #tpu.memory_space<vmem>>)
      %c0_i32_154 = arith.constant 0 : i32
      %c0_i32_155 = arith.constant 0 : i32
      %212 = tpu.memref_slice %arg3[%c0_i32_154, %c0_i32_155] : memref<512x256xf32, #tpu.memory_space<any>> -> memref<1x256xf32, #tpu.memory_space<any>>
      %c11_i32_156 = arith.constant 11 : i32
      %c0_i32_157 = arith.constant 0 : i32
      %213 = tpu.memref_slice %arg8[%152, %c11_i32_156, %c0_i32_157] : memref<2x16x256xf32, #tpu.memory_space<vmem>> -> memref<1x1x256xf32, #tpu.memory_space<vmem>>
      %214 = tpu.memref_squeeze %213 : memref<1x1x256xf32, #tpu.memory_space<vmem>> -> memref<1x256xf32, #tpu.memory_space<vmem>>
      %215 = tpu.memref_slice %arg9[%152] : memref<2x!tpu.dma_semaphore, #tpu.memory_space<semaphore_mem>> -> memref<1x!tpu.dma_semaphore, #tpu.memory_space<semaphore_mem>>
      %216 = tpu.memref_squeeze %215 : memref<1x!tpu.dma_semaphore, #tpu.memory_space<semaphore_mem>> -> memref<!tpu.dma_semaphore, #tpu.memory_space<semaphore_mem>>
      tpu.wait_dma2 semaphore(%216 : memref<!tpu.dma_semaphore, #tpu.memory_space<semaphore_mem>>) src(%212 : memref<1x256xf32, #tpu.memory_space<any>>) dst(%214 : memref<1x256xf32, #tpu.memory_space<vmem>>)
      %c0_i32_158 = arith.constant 0 : i32
      %c0_i32_159 = arith.constant 0 : i32
      %217 = tpu.memref_slice %arg3[%c0_i32_158, %c0_i32_159] : memref<512x256xf32, #tpu.memory_space<any>> -> memref<1x256xf32, #tpu.memory_space<any>>
      %c12_i32_160 = arith.constant 12 : i32
      %c0_i32_161 = arith.constant 0 : i32
      %218 = tpu.memref_slice %arg8[%152, %c12_i32_160, %c0_i32_161] : memref<2x16x256xf32, #tpu.memory_space<vmem>> -> memref<1x1x256xf32, #tpu.memory_space<vmem>>
      %219 = tpu.memref_squeeze %218 : memref<1x1x256xf32, #tpu.memory_space<vmem>> -> memref<1x256xf32, #tpu.memory_space<vmem>>
      %220 = tpu.memref_slice %arg9[%152] : memref<2x!tpu.dma_semaphore, #tpu.memory_space<semaphore_mem>> -> memref<1x!tpu.dma_semaphore, #tpu.memory_space<semaphore_mem>>
      %221 = tpu.memref_squeeze %220 : memref<1x!tpu.dma_semaphore, #tpu.memory_space<semaphore_mem>> -> memref<!tpu.dma_semaphore, #tpu.memory_space<semaphore_mem>>
      tpu.wait_dma2 semaphore(%221 : memref<!tpu.dma_semaphore, #tpu.memory_space<semaphore_mem>>) src(%217 : memref<1x256xf32, #tpu.memory_space<any>>) dst(%219 : memref<1x256xf32, #tpu.memory_space<vmem>>)
      %c0_i32_162 = arith.constant 0 : i32
      %c0_i32_163 = arith.constant 0 : i32
      %222 = tpu.memref_slice %arg3[%c0_i32_162, %c0_i32_163] : memref<512x256xf32, #tpu.memory_space<any>> -> memref<1x256xf32, #tpu.memory_space<any>>
      %c13_i32_164 = arith.constant 13 : i32
      %c0_i32_165 = arith.constant 0 : i32
      %223 = tpu.memref_slice %arg8[%152, %c13_i32_164, %c0_i32_165] : memref<2x16x256xf32, #tpu.memory_space<vmem>> -> memref<1x1x256xf32, #tpu.memory_space<vmem>>
      %224 = tpu.memref_squeeze %223 : memref<1x1x256xf32, #tpu.memory_space<vmem>> -> memref<1x256xf32, #tpu.memory_space<vmem>>
      %225 = tpu.memref_slice %arg9[%152] : memref<2x!tpu.dma_semaphore, #tpu.memory_space<semaphore_mem>> -> memref<1x!tpu.dma_semaphore, #tpu.memory_space<semaphore_mem>>
      %226 = tpu.memref_squeeze %225 : memref<1x!tpu.dma_semaphore, #tpu.memory_space<semaphore_mem>> -> memref<!tpu.dma_semaphore, #tpu.memory_space<semaphore_mem>>
      tpu.wait_dma2 semaphore(%226 : memref<!tpu.dma_semaphore, #tpu.memory_space<semaphore_mem>>) src(%222 : memref<1x256xf32, #tpu.memory_space<any>>) dst(%224 : memref<1x256xf32, #tpu.memory_space<vmem>>)
      %c0_i32_166 = arith.constant 0 : i32
      %c0_i32_167 = arith.constant 0 : i32
      %227 = tpu.memref_slice %arg3[%c0_i32_166, %c0_i32_167] : memref<512x256xf32, #tpu.memory_space<any>> -> memref<1x256xf32, #tpu.memory_space<any>>
      %c14_i32_168 = arith.constant 14 : i32
      %c0_i32_169 = arith.constant 0 : i32
      %228 = tpu.memref_slice %arg8[%152, %c14_i32_168, %c0_i32_169] : memref<2x16x256xf32, #tpu.memory_space<vmem>> -> memref<1x1x256xf32, #tpu.memory_space<vmem>>
      %229 = tpu.memref_squeeze %228 : memref<1x1x256xf32, #tpu.memory_space<vmem>> -> memref<1x256xf32, #tpu.memory_space<vmem>>
      %230 = tpu.memref_slice %arg9[%152] : memref<2x!tpu.dma_semaphore, #tpu.memory_space<semaphore_mem>> -> memref<1x!tpu.dma_semaphore, #tpu.memory_space<semaphore_mem>>
      %231 = tpu.memref_squeeze %230 : memref<1x!tpu.dma_semaphore, #tpu.memory_space<semaphore_mem>> -> memref<!tpu.dma_semaphore, #tpu.memory_space<semaphore_mem>>
      tpu.wait_dma2 semaphore(%231 : memref<!tpu.dma_semaphore, #tpu.memory_space<semaphore_mem>>) src(%227 : memref<1x256xf32, #tpu.memory_space<any>>) dst(%229 : memref<1x256xf32, #tpu.memory_space<vmem>>)
      %c0_i32_170 = arith.constant 0 : i32
      %c0_i32_171 = arith.constant 0 : i32
      %232 = tpu.memref_slice %arg3[%c0_i32_170, %c0_i32_171] : memref<512x256xf32, #tpu.memory_space<any>> -> memref<1x256xf32, #tpu.memory_space<any>>
      %c15_i32_172 = arith.constant 15 : i32
      %c0_i32_173 = arith.constant 0 : i32
      %233 = tpu.memref_slice %arg8[%152, %c15_i32_172, %c0_i32_173] : memref<2x16x256xf32, #tpu.memory_space<vmem>> -> memref<1x1x256xf32, #tpu.memory_space<vmem>>
      %234 = tpu.memref_squeeze %233 : memref<1x1x256xf32, #tpu.memory_space<vmem>> -> memref<1x256xf32, #tpu.memory_space<vmem>>
      %235 = tpu.memref_slice %arg9[%152] : memref<2x!tpu.dma_semaphore, #tpu.memory_space<semaphore_mem>> -> memref<1x!tpu.dma_semaphore, #tpu.memory_space<semaphore_mem>>
      %236 = tpu.memref_squeeze %235 : memref<1x!tpu.dma_semaphore, #tpu.memory_space<semaphore_mem>> -> memref<!tpu.dma_semaphore, #tpu.memory_space<semaphore_mem>>
      tpu.wait_dma2 semaphore(%236 : memref<!tpu.dma_semaphore, #tpu.memory_space<semaphore_mem>>) src(%232 : memref<1x256xf32, #tpu.memory_space<any>>) dst(%234 : memref<1x256xf32, #tpu.memory_space<vmem>>)
      %c16_i32 = arith.constant 16 : i32
      %237 = arith.muli %151, %c16_i32 : i32
      %238 = tpu.assume_multiple %237, 16 : i32
      %239 = arith.index_cast %152 : i32 to index
      %c0_174 = arith.constant 0 : index
      %c0_175 = arith.constant 0 : index
      %240 = vector.load %arg8[%239, %c0_174, %c0_175] : memref<2x16x256xf32, #tpu.memory_space<vmem>>, vector<1x16x256xf32>
      %241 = vector.shape_cast %240 : vector<1x16x256xf32> to vector<16x256xf32>
      %242 = arith.index_cast %238 : i32 to index
      %c0_176 = arith.constant 0 : index
      %243 = vector.load %arg4[%242, %c0_176] : memref<64x256xf32, #tpu.memory_space<vmem>>, vector<16x256xf32>
      %244 = arith.addf %241, %243 : vector<16x256xf32>
      %cst = arith.constant dense<0.000000e+00> : vector<16xf32>
      %245 = vector.multi_reduction <add>, %244, %cst [1] : vector<16x256xf32> to vector<16xf32>
      %246 = vector.shape_cast %245 : vector<16xf32> to vector<16x1xf32>
      %cst_177 = arith.constant 2.560000e+02 : f32
      %247 = vector.broadcast %cst_177 : f32 to vector<16x1xf32>
      %248 = arith.divf %246, %247 : vector<16x1xf32>
      %249 = vector.broadcast %248 : vector<16x1xf32> to vector<16x256xf32>
      %250 = arith.subf %244, %249 : vector<16x256xf32>
      %251 = arith.mulf %250, %250 : vector<16x256xf32>
      %cst_178 = arith.constant dense<0.000000e+00> : vector<16xf32>
      %252 = vector.multi_reduction <add>, %251, %cst_178 [1] : vector<16x256xf32> to vector<16xf32>
      %253 = vector.shape_cast %252 : vector<16xf32> to vector<16x1xf32>
      %cst_179 = arith.constant 2.560000e+02 : f32
      %254 = vector.broadcast %cst_179 : f32 to vector<16x1xf32>
      %255 = arith.divf %253, %254 : vector<16x1xf32>
      %256 = vector.broadcast %248 : vector<16x1xf32> to vector<16x256xf32>
      %257 = arith.subf %244, %256 : vector<16x256xf32>
      %cst_180 = arith.constant 9.99999974E-6 : f32
      %258 = vector.broadcast %cst_180 : f32 to vector<16x1xf32>
      %259 = arith.addf %255, %258 : vector<16x1xf32>
      %260 = math.rsqrt %259 : vector<16x1xf32>
      %261 = vector.broadcast %260 : vector<16x1xf32> to vector<16x256xf32>
      %262 = arith.mulf %257, %261 : vector<16x256xf32>
      %263 = vector.broadcast %147 : vector<1x256xf32> to vector<16x256xf32>
      %264 = arith.mulf %262, %263 : vector<16x256xf32>
      %265 = vector.broadcast %148 : vector<1x256xf32> to vector<16x256xf32>
      %266 = arith.addf %264, %265 : vector<16x256xf32>
      %c0_181 = arith.constant 0 : index
      %267 = arith.index_cast %238 : i32 to index
      %c0_182 = arith.constant 0 : index
      %268 = vector.load %arg7[%c0_181, %267, %c0_182] : memref<1x64x256xf32, #tpu.memory_space<vmem>>, vector<1x16x256xf32>
      %269 = vector.shape_cast %268 : vector<1x16x256xf32> to vector<16x256xf32>
      %270 = vector.shape_cast %266 : vector<16x256xf32> to vector<1x16x256xf32>
      tpu.vector_store %arg7[%c0_181, %267, %c0_182], %270 {strides = array<i32>} : memref<1x64x256xf32, #tpu.memory_space<vmem>>, vector<1x16x256xf32>,
    }
    %c4_i32_103 = arith.constant 4 : i32
    return
  }
  func.func @transform_1(%arg0: i32, %arg1: i32, %arg2: memref<128xi32, #tpu.memory_space<smem>>) -> (i32, i32) {
    %c0_i32 = arith.constant 0 : i32
    %c0_i32_0 = arith.constant 0 : i32
    return %arg1, %c0_i32 : i32, i32
  }
  func.func @transform_2(%arg0: i32, %arg1: i32, %arg2: memref<128xi32, #tpu.memory_space<smem>>) -> (i32, i32) {
    %c0_i32 = arith.constant 0 : i32
    %c0_i32_0 = arith.constant 0 : i32
    %c0_i32_1 = arith.constant 0 : i32
    return %c0_i32, %c0_i32_0 : i32, i32
  }
  func.func @transform_3(%arg0: i32, %arg1: i32, %arg2: memref<128xi32, #tpu.memory_space<smem>>) -> (i32, i32) {
    %c0_i32 = arith.constant 0 : i32
    %c0_i32_0 = arith.constant 0 : i32
    %c0_i32_1 = arith.constant 0 : i32
    return %c0_i32, %c0_i32_0 : i32, i32
  }
  func.func @transform_4(%arg0: i32, %arg1: i32, %arg2: memref<128xi32, #tpu.memory_space<smem>>) -> (i32, i32, i32) {
    %c0_i32 = arith.constant 0 : i32
    %c0_i32_0 = arith.constant 0 : i32
    return %arg0, %arg1, %c0_i32 : i32, i32, i32
  }
}

</mosaic_0001>

<llo_original>
// kernel: tpu_custom_call.1
$region0: #{tpu_custom_call.1}
  #allocation0 [shape = 'u32[]', space=smem, size = 0x4, offset = 0x4, fixed_abs, tag = 'smem constant byte address 0x4 - core index']
  #allocation1 [shape = 'u32[144,128]{1,0:T(1,128)}', space=vmem, size = 0x12000, scoped, tag = 'internal scratch']
  #allocation2 [shape = 'f32[2,16,256]{2,1,0:T(8,128)}', space=vmem, size = 0x8000, scoped, tag = 'scratch operand']
  #allocation3 [shape = 's32[2]{0}', space=sflag, size = 0x8, scoped, tag = 'scratch operand']
  #allocation4 [shape = 's32[1]{0}', space=sflag, size = 0x4, scoped, tag = 'scoped memory for tpu_custom_call.1']
  #allocation5 [shape = 'u8[512]{0}', space=smem, size = 0x200, scoped, tag = 'prefetched SMEM operand 0']
  #allocation10 [shape = 's32[]', space=sflag, size = 0x4, offset = 0, fixed_abs, tag = 'sflag constant byte address 0x0 - dummy sync flag']
  #allocation11 [shape = 's32[]', space=sflag, size = 0x4, offset = 0, fixed_abs, tag = 'sflag constant byte address 0x0 - dummy sync flag']
  #allocation12 [shape = 's32[]', space=sflag, size = 0x4, offset = 0, fixed_abs, tag = 'sflag constant byte address 0x0 - dummy sync flag']
  #allocation13 [shape = 's32[]', space=sflag, size = 0x4, offset = 0, fixed_abs, tag = 'sflag constant byte address 0x0 - dummy sync flag']
  #allocation14 [shape = 's32[]', space=sflag, size = 0x4, offset = 0, fixed_abs, tag = 'sflag constant byte address 0x0 - dummy sync flag']
  #allocation15 [shape = 's32[]', space=sflag, size = 0x4, offset = 0, fixed_abs, tag = 'sflag constant byte address 0x0 - dummy sync flag']
  #allocation16 [shape = 's32[]', space=sflag, size = 0x4, offset = 0, fixed_abs, tag = 'sflag constant byte address 0x0 - dummy sync flag']
  #allocation17 [shape = 's32[]', space=sflag, size = 0x4, offset = 0, fixed_abs, tag = 'sflag constant byte address 0x0 - dummy sync flag']
  #allocation18 [shape = 's32[]', space=sflag, size = 0x4, offset = 0, fixed_abs, tag = 'sflag constant byte address 0x0 - dummy sync flag']
  #allocation19 [shape = 's32[]', space=sflag, size = 0x4, offset = 0, fixed_abs, tag = 'sflag constant byte address 0x0 - dummy sync flag']
  #allocation20 [shape = 's32[]', space=sflag, size = 0x4, offset = 0, fixed_abs, tag = 'sflag constant byte address 0x0 - dummy sync flag']
  #allocation21 [shape = 's32[]', space=sflag, size = 0x4, offset = 0, fixed_abs, tag = 'sflag constant byte address 0x0 - dummy sync flag']
  #allocation22 [shape = 's32[]', space=sflag, size = 0x4, offset = 0, fixed_abs, tag = 'sflag constant byte address 0x0 - dummy sync flag']
  #allocation23 [shape = 's32[]', space=sflag, size = 0x4, offset = 0, fixed_abs, tag = 'sflag constant byte address 0x0 - dummy sync flag']
  #allocation24 [shape = 's32[]', space=sflag, size = 0x4, offset = 0, fixed_abs, tag = 'sflag constant byte address 0x0 - dummy sync flag']
  #allocation25 [shape = 's32[]', space=sflag, size = 0x4, offset = 0, fixed_abs, tag = 'sflag constant byte address 0x0 - dummy sync flag']
  #allocation26 [shape = 's32[]', space=sflag, size = 0x4, offset = 0, fixed_abs, tag = 'sflag constant byte address 0x0 - dummy sync flag']
  #allocation27 [shape = 's32[]', space=sflag, size = 0x4, offset = 0, fixed_abs, tag = 'sflag constant byte address 0x0 - dummy sync flag']
  #allocation28 [shape = 's32[]', space=sflag, size = 0x4, offset = 0, fixed_abs, tag = 'sflag constant byte address 0x0 - dummy sync flag']
  #allocation29 [shape = 's32[]', space=sflag, size = 0x4, offset = 0, fixed_abs, tag = 'sflag constant byte address 0x0 - dummy sync flag']
  #allocation30 [shape = 's32[]', space=sflag, size = 0x4, offset = 0, fixed_abs, tag = 'sflag constant byte address 0x0 - dummy sync flag']
  #allocation31 [shape = 's32[]', space=sflag, size = 0x4, offset = 0, fixed_abs, tag = 'sflag constant byte address 0x0 - dummy sync flag']
  #allocation32 [shape = 's32[]', space=sflag, size = 0x4, offset = 0, fixed_abs, tag = 'sflag constant byte address 0x0 - dummy sync flag']
  #allocation33 [shape = 's32[]', space=sflag, size = 0x4, offset = 0, fixed_abs, tag = 'sflag constant byte address 0x0 - dummy sync flag']
  #allocation34 [shape = 's32[]', space=sflag, size = 0x4, offset = 0, fixed_abs, tag = 'sflag constant byte address 0x0 - dummy sync flag']
  #allocation35 [shape = 's32[]', space=sflag, size = 0x4, offset = 0, fixed_abs, tag = 'sflag constant byte address 0x0 - dummy sync flag']
  #allocation36 [shape = 's32[]', space=sflag, size = 0x4, offset = 0, fixed_abs, tag = 'sflag constant byte address 0x0 - dummy sync flag']
  #allocation37 [shape = 's32[]', space=sflag, size = 0x4, offset = 0, fixed_abs, tag = 'sflag constant byte address 0x0 - dummy sync flag']
  #allocation38 [shape = 's32[]', space=sflag, size = 0x4, offset = 0, fixed_abs, tag = 'sflag constant byte address 0x0 - dummy sync flag']
  #allocation39 [shape = 's32[]', space=sflag, size = 0x4, offset = 0, fixed_abs, tag = 'sflag constant byte address 0x0 - dummy sync flag']
  #allocation40 [shape = 's32[]', space=sflag, size = 0x4, offset = 0, fixed_abs, tag = 'sflag constant byte address 0x0 - dummy sync flag']
  #allocation41 [shape = 's32[]', space=sflag, size = 0x4, offset = 0, fixed_abs, tag = 'sflag constant byte address 0x0 - dummy sync flag']
  %s0 = inlined_call_operand.hbm [shape: s32[128], index: 0, kind: input, shape index: {}]
  %s1 = inlined_call_operand.hbm [shape: f32[512,256], index: 1, kind: input, shape index: {}]
  %s2 = inlined_call_operand.hbm [shape: f32[128,256], index: 2, kind: input, shape index: {}]
  %s3 = inlined_call_operand.vmem [shape: f32[1,256], index: 3, kind: input, shape index: {}]
  %s4 = inlined_call_operand.vmem [shape: f32[1,256], index: 4, kind: input, shape index: {}]
  %s5 = inlined_call_operand.hbm [shape: f32[2,64,256], index: 5, kind: output, shape index: {}]
  %s6 = sld [smem:[#allocation0]]
  $region60: #{tpu_custom_call.1} parent=0
    _
  %s8 = ssub.s32 1, %s6
  %s9 = scalar_select 0, %s8, %s6
  %11 = dma.hbm_to_smem %s0, 16, [#allocation5], [#allocation4]
  %12 = dma.done [#allocation4], 16
  %13 = sfence
  $region1: #{tpu_custom_call.1} parent=0
    #allocation6 [shape = 'u8[65536]{0}', space=vmem, size = 0x10000, scoped, tag = 'input window, operand 2, single buffered']
    #allocation7 [shape = 's32[2]{0}', space=sflag, size = 0x8, scoped, tag = 'scoped memory for tpu_custom_call.1']
    #allocation8 [shape = 's32[2]{0}', space=sflag, size = 0x8, scoped, tag = 'scoped memory for tpu_custom_call.1']
    #allocation9 [shape = 'u8[131072]{0}', space=vmem, size = 0x20000, scoped, tag = 'output window, operand 0']
    %14 = vsyncpa [#allocation7], 0
    %15 = vsyncpa [#allocation8], 0
    %s16 = scalar_lea.sflag [#allocation8], 1
    %17 = vsyncpa %s16, 0
    loop: start=0, step=1, limit=4
    $region2: #{tpu_custom_call.1} parent=1 // loop_pre_header
      _
    $region3: #{tpu_custom_call.1} parent=1 // loop_header
      %s19 = sphi 0, %s23
      %p20 = scmp.ge.s32.totalorder %s19, 4
      %s26 = sphi 0, %s38
      %s27 = sphi 0, %s34
      %s28 = sphi 0, %s26
      %s29 = sphi 0, %s27
      %s30 = sphi 0, %s28
      %s31 = sphi 0, %s29
      %s41 = sphi 0, %s43
      %s44 = sphi 0, %s41
      %s45 = sphi 0, %s44
      %s61 = sphi 0, %s45
      %s65 = sphi 0, %s65
      %s67 = sphi 0, %s65
      %s68 = sphi 0, %s67
      %s82 = sphi 0, %s68
      %s86 = sphi 0, %s86
      %s88 = sphi 0, %s86
      %s89 = sphi 0, %s88
      %s103 = sphi 0, %s89
      %s111 = sphi 0, %s113
      %s114 = sphi 0, %s111
      %s115 = sphi 0, %s114
      %s131 = sphi 0, %s115
    $region4: #{tpu_custom_call.1} parent=1 // loop_header_branch
      %22 = sbr.rel (%p20) target = $region8
    $region5: #{tpu_custom_call.1} parent=1 // loop_body
      %s24 = ssub.s32 %s19, 1
      %s25 = ssub.s32 %s19, 2
      %s32 = sadd.s32 1, %s27
      %p33 = scmp.ge.s32.totalorder %s32, 1
      %s34 = scalar_select %p33, 0, %s32
      %s35 = sadd.s32 1, %s26
      %s36 = scalar_select %p33, %s35, %s26
      %p37 = scmp.ge.s32.totalorder %s36, 2
      %s38 = scalar_select %p37, 0, %s36
      %s39 = ssub.s32 %s27, %s34
      %p40 = scmp.eq.s32.totalorder %s39, 0
      %s42 = sadd.s32 %s41, 1
      %s43 = scalar_select %p40, %s41, %s42
      %p46 = pneg %p40
      %p47 = scmp.eq.s32.totalorder %s19, 1
      %p48 = por %p46, %p47
      %p49 = scmp.ne.s32.totalorder %s41, %s44
      %p50 = scmp.eq.s32.totalorder %s19, 0
      %p51 = por %p49, %p50
      %p52 = scmp.ne.s32.totalorder %s41, %s44
      %p53 = scmp.eq.s32.totalorder %s24, 1
      %p54 = por %p52, %p53
      %p55 = scmp.ne.s32.totalorder %s44, %s45
      %p56 = scmp.eq.s32.totalorder %s24, 0
      %p57 = por %p55, %p56
      %p58 = scmp.ne.s32.totalorder %s44, %s45
      %p59 = scmp.eq.s32.totalorder %s25, 1
      %p60 = por %p58, %p59
      %p62 = scmp.ne.s32.totalorder %s45, %s61
      %p63 = scmp.eq.s32.totalorder %s25, 0
      %p64 = por %p62, %p63
      %s66 = sadd.s32 %s65, 1
      %p69 = scmp.eq.s32.totalorder %s19, 1
      %p70 = scmp.ne.s32.totalorder %s65, %s67
      %p71 = scmp.eq.s32.totalorder %s19, 0
      %p72 = por %p70, %p71
      %p73 = scmp.ne.s32.totalorder %s65, %s67
      %p74 = scmp.eq.s32.totalorder %s24, 1
      %p75 = por %p73, %p74
      %p76 = scmp.ne.s32.totalorder %s67, %s68
      %p77 = scmp.eq.s32.totalorder %s24, 0
      %p78 = por %p76, %p77
      %p79 = scmp.ne.s32.totalorder %s67, %s68
      %p80 = scmp.eq.s32.totalorder %s25, 1
      %p81 = por %p79, %p80
      %p83 = scmp.ne.s32.totalorder %s68, %s82
      %p84 = scmp.eq.s32.totalorder %s25, 0
      %p85 = por %p83, %p84
      %s87 = sadd.s32 %s86, 1
      %p90 = scmp.eq.s32.totalorder %s19, 1
      %p91 = scmp.ne.s32.totalorder %s86, %s88
      %p92 = scmp.eq.s32.totalorder %s19, 0
      %p93 = por %p91, %p92
      %p94 = scmp.ne.s32.totalorder %s86, %s88
      %p95 = scmp.eq.s32.totalorder %s24, 1
      %p96 = por %p94, %p95
      %p97 = scmp.ne.s32.totalorder %s88, %s89
      %p98 = scmp.eq.s32.totalorder %s24, 0
      %p99 = por %p97, %p98
      %p100 = scmp.ne.s32.totalorder %s88, %s89
      %p101 = scmp.eq.s32.totalorder %s25, 1
      %p102 = por %p100, %p101
      %p104 = scmp.ne.s32.totalorder %s89, %s103
      %p105 = scmp.eq.s32.totalorder %s25, 0
      %p106 = por %p104, %p105
      %s107 = ssub.s32 %s26, %s38
      %s108 = ssub.s32 %s27, %s34
      %s109 = sor.u32 %s107, %s108
      %p110 = scmp.eq.s32.totalorder %s109, 0
      %s112 = sadd.s32 %s111, 1
      %s113 = scalar_select %p110, %s111, %s112
      %p116 = pneg %p110
      %p117 = scmp.eq.s32.totalorder %s19, 1
      %p118 = por %p116, %p117
      %p119 = scmp.ne.s32.totalorder %s111, %s114
      %p120 = scmp.eq.s32.totalorder %s19, 0
      %p121 = por %p119, %p120
      %p122 = scmp.ne.s32.totalorder %s111, %s114
      %p123 = scmp.eq.s32.totalorder %s24, 1
      %p124 = por %p122, %p123
      %p125 = scmp.ne.s32.totalorder %s114, %s115
      %p126 = scmp.eq.s32.totalorder %s24, 0
      %p127 = por %p125, %p126
      %p128 = scmp.ne.s32.totalorder %s114, %s115
      %p129 = scmp.eq.s32.totalorder %s25, 1
      %p130 = por %p128, %p129
      %p132 = scmp.ne.s32.totalorder %s115, %s131
      %p133 = scmp.eq.s32.totalorder %s25, 0
      %p134 = por %p132, %p133
      %p135 = scmp.le.s32.totalorder 1, %s19
      %p136 = scmp.lt.s32.totalorder %s19, 3
      %p137 = pnand %p135, %p136
      %p138 = pneg %p137
      // Predicated region
      $region9: #{tpu_custom_call.1} parent=5 // pred_check
        _
      $region10: #{tpu_custom_call.1} parent=5 // pred_check_branch
        %140 = sbr.rel (%p137) target = $region12
      $region11: #{tpu_custom_call.1} parent=5 // pred_region
        %s141 = ssub.s32 %s19, 1
        // Predicated region
        $region13: #{tpu_custom_call.1} parent=11 // pred_check
          %p142 = pneg %p57
        $region14: #{tpu_custom_call.1} parent=11 // pred_check_branch
          %144 = sbr.rel (%p142) target = $region16
        $region15: #{tpu_custom_call.1} parent=11 // pred_region
          %s145 = smul.u32 8, %s29
          %s147 = ssub.s32 2048, 2048
          %148 = vsyncadd [#allocation7], %s147
          %s149 = smul.addr %s145, 2
          %s150 = smul.addr %s149, 128
          %s151 = scalar_lea.hbm %s2, %s150
          %s152 = sshll.u32 [#allocation6], 4
          %s153 = int_to_ptr.vmem [resolvable:$true] %s152
          %158 = dma.hbm_to_vmem [thread:$0]  %s151, 2048, %s153, [#allocation7], 256, 256, 16
        $region16: #{tpu_custom_call.1} parent=11 // pred_fallthru
          _
        // Predicated region
        $region17: #{tpu_custom_call.1} parent=11 // pred_check
          %p159 = pneg %p78
        $region18: #{tpu_custom_call.1} parent=11 // pred_check_branch
          %161 = sbr.rel (%p159) target = $region20
        $region19: #{tpu_custom_call.1} parent=11 // pred_region
          _
        $region20: #{tpu_custom_call.1} parent=11 // pred_fallthru
          _
        // Predicated region
        $region21: #{tpu_custom_call.1} parent=11 // pred_check
          %p162 = pneg %p99
        $region22: #{tpu_custom_call.1} parent=11 // pred_check_branch
          %164 = sbr.rel (%p162) target = $region24
        $region23: #{tpu_custom_call.1} parent=11 // pred_region
          _
        $region24: #{tpu_custom_call.1} parent=11 // pred_fallthru
          _
      $region12: #{tpu_custom_call.1} parent=5 // pred_fallthru
        _
      %p165 = scmp.lt.s32.totalorder %s19, 2
      // Predicated region
      $region25: #{tpu_custom_call.1} parent=5 // pred_check
        %p166 = pneg %p165
      $region26: #{tpu_custom_call.1} parent=5 // pred_check_branch
        %168 = sbr.rel (%p166) target = $region28
      $region27: #{tpu_custom_call.1} parent=5 // pred_region
        _
      $region28: #{tpu_custom_call.1} parent=5 // pred_fallthru
        _
      %p169 = scmp.le.s32.totalorder 1, %s19
      %p170 = scmp.lt.s32.totalorder %s19, 3
      %p171 = pnand %p169, %p170
      %p172 = pneg %p171
      // Predicated region
      $region29: #{tpu_custom_call.1} parent=5 // pred_check
        _
      $region30: #{tpu_custom_call.1} parent=5 // pred_check_branch
        %174 = sbr.rel (%p171) target = $region32
      $region31: #{tpu_custom_call.1} parent=5 // pred_region
        %s175 = ssub.s32 %s19, 1
        // Predicated region
        $region33: #{tpu_custom_call.1} parent=31 // pred_check
          %p176 = pneg %p57
        $region34: #{tpu_custom_call.1} parent=31 // pred_check_branch
          %178 = sbr.rel (%p176) target = $region36
        $region35: #{tpu_custom_call.1} parent=31 // pred_region
          %179 = dma.done [#allocation7], 2048
        $region36: #{tpu_custom_call.1} parent=31 // pred_fallthru
          _
        %p180 = pneg %p57
        %p181 = pneg %p54
        %p182 = pneg %p78
        %p183 = pneg %p75
        %p184 = pneg %p99
        %p185 = pneg %p96
        %p186 = pneg %p127
        %p187 = pneg %p124
        %s188 = sand.u32 %s114, 1
        %s189 = scalar_lea.sflag [#allocation8], %s188
        %s190 = sand.u32 %s114, 1
        %s191 = smul.addr %s190, 128
        %s192 = scalar_lea.vmem [#allocation9], %s191
        %s193 = smul.u32 8, %s29
        %s194 = smul.u32 8, %s29
        %s195 = smul.u32 %s28, 64
        %s196 = smul.u32 %s29, 64
        %s197 = sadd.s32 %s195, %s196
        %s198 = sld [smem:[#allocation5 + %s197]]
        %s199 = sshrl.u32 %s198, 3
        %s200 = sand.u32 %s198, 7
        %s201 = smul.u32 %s199, 16
        %s202 = sadd.s32 %s200, %s201
        %s203 = smul.addr %s202, 16
        %s204 = scalar_lea.hbm %s1, %s203
        %s206 = sshll.u32 [#allocation2], 4
        %s207 = int_to_ptr.vmem [resolvable:$true] %s206
        %209 = dma.hbm_to_vmem [thread:$0]  %s204, 32, %s207, [#allocation3], 128, 128, 1
        %s210 = sadd.s32 %s197, 1
        %s211 = sld [smem:[#allocation5 + %s210]]
        %s212 = sshrl.u32 %s211, 3
        %s213 = sand.u32 %s211, 7
        %s214 = smul.u32 %s212, 16
        %s215 = sadd.s32 %s213, %s214
        %s216 = smul.addr %s215, 16
        %s217 = scalar_lea.hbm %s1, %s216
        %s218 = scalar_lea.vmem [#allocation2], 1
        %s220 = sshll.u32 %s218, 4
        %s221 = int_to_ptr.vmem [resolvable:$true] %s220
        %223 = dma.hbm_to_vmem [thread:$0]  %s217, 32, %s221, [#allocation3], 128, 128, 1
        %s224 = sadd.s32 %s197, 2
        %s225 = sld [smem:[#allocation5 + %s224]]
        %s226 = sshrl.u32 %s225, 3
        %s227 = sand.u32 %s225, 7
        %s228 = smul.u32 %s226, 16
        %s229 = sadd.s32 %s227, %s228
        %s230 = smul.addr %s229, 16
        %s231 = scalar_lea.hbm %s1, %s230
        %s232 = scalar_lea.vmem [#allocation2], 2
        %s234 = sshll.u32 %s232, 4
        %s235 = int_to_ptr.vmem [resolvable:$true] %s234
        %237 = dma.hbm_to_vmem [thread:$0]  %s231, 32, %s235, [#allocation3], 128, 128, 1
        %s238 = sadd.s32 %s197, 3
        %s239 = sld [smem:[#allocation5 + %s238]]
        %s240 = sshrl.u32 %s239, 3
        %s241 = sand.u32 %s239, 7
        %s242 = smul.u32 %s240, 16
        %s243 = sadd.s32 %s241, %s242
        %s244 = smul.addr %s243, 16
        %s245 = scalar_lea.hbm %s1, %s244
        %s246 = scalar_lea.vmem [#allocation2], 3
        %s248 = sshll.u32 %s246, 4
        %s249 = int_to_ptr.vmem [resolvable:$true] %s248
        %251 = dma.hbm_to_vmem [thread:$0]  %s245, 32, %s249, [#allocation3], 128, 128, 1
        %s252 = sadd.s32 %s197, 4
        %s253 = sld [smem:[#allocation5 + %s252]]
        %s254 = sshrl.u32 %s253, 3
        %s255 = sand.u32 %s253, 7
        %s256 = smul.u32 %s254, 16
        %s257 = sadd.s32 %s255, %s256
        %s258 = smul.addr %s257, 16
        %s259 = scalar_lea.hbm %s1, %s258
        %s260 = scalar_lea.vmem [#allocation2], 4
        %s262 = sshll.u32 %s260, 4
        %s263 = int_to_ptr.vmem [resolvable:$true] %s262
        %265 = dma.hbm_to_vmem [thread:$0]  %s259, 32, %s263, [#allocation3], 128, 128, 1
        %s266 = sadd.s32 %s197, 5
        %s267 = sld [smem:[#allocation5 + %s266]]
        %s268 = sshrl.u32 %s267, 3
        %s269 = sand.u32 %s267, 7
        %s270 = smul.u32 %s268, 16
        %s271 = sadd.s32 %s269, %s270
        %s272 = smul.addr %s271, 16
        %s273 = scalar_lea.hbm %s1, %s272
        %s274 = scalar_lea.vmem [#allocation2], 5
        %s276 = sshll.u32 %s274, 4
        %s277 = int_to_ptr.vmem [resolvable:$true] %s276
        %279 = dma.hbm_to_vmem [thread:$0]  %s273, 32, %s277, [#allocation3], 128, 128, 1
        %s280 = sadd.s32 %s197, 6
        %s281 = sld [smem:[#allocation5 + %s280]]
        %s282 = sshrl.u32 %s281, 3
        %s283 = sand.u32 %s281, 7
        %s284 = smul.u32 %s282, 16
        %s285 = sadd.s32 %s283, %s284
        %s286 = smul.addr %s285, 16
        %s287 = scalar_lea.hbm %s1, %s286
        %s288 = scalar_lea.vmem [#allocation2], 6
        %s290 = sshll.u32 %s288, 4
        %s291 = int_to_ptr.vmem [resolvable:$true] %s290
        %293 = dma.hbm_to_vmem [thread:$0]  %s287, 32, %s291, [#allocation3], 128, 128, 1
        %s294 = sadd.s32 %s197, 7
        %s295 = sld [smem:[#allocation5 + %s294]]
        %s296 = sshrl.u32 %s295, 3
        %s297 = sand.u32 %s295, 7
        %s298 = smul.u32 %s296, 16
        %s299 = sadd.s32 %s297, %s298
        %s300 = smul.addr %s299, 16
        %s301 = scalar_lea.hbm %s1, %s300
        %s302 = scalar_lea.vmem [#allocation2], 7
        %s304 = sshll.u32 %s302, 4
        %s305 = int_to_ptr.vmem [resolvable:$true] %s304
        %307 = dma.hbm_to_vmem [thread:$0]  %s301, 32, %s305, [#allocation3], 128, 128, 1
        %s308 = sadd.s32 %s197, 8
        %s309 = sld [smem:[#allocation5 + %s308]]
        %s310 = sshrl.u32 %s309, 3
        %s311 = sand.u32 %s309, 7
        %s312 = smul.u32 %s310, 16
        %s313 = sadd.s32 %s311, %s312
        %s314 = smul.addr %s313, 16
        %s315 = scalar_lea.hbm %s1, %s314
        %s316 = scalar_lea.vmem [#allocation2], 16
        %s318 = sshll.u32 %s316, 4
        %s319 = int_to_ptr.vmem [resolvable:$true] %s318
        %321 = dma.hbm_to_vmem [thread:$0]  %s315, 32, %s319, [#allocation3], 128, 128, 1
        %s322 = sadd.s32 %s197, 9
        %s323 = sld [smem:[#allocation5 + %s322]]
        %s324 = sshrl.u32 %s323, 3
        %s325 = sand.u32 %s323, 7
        %s326 = smul.u32 %s324, 16
        %s327 = sadd.s32 %s325, %s326
        %s328 = smul.addr %s327, 16
        %s329 = scalar_lea.hbm %s1, %s328
        %s330 = scalar_lea.vmem [#allocation2], 17
        %s332 = sshll.u32 %s330, 4
        %s333 = int_to_ptr.vmem [resolvable:$true] %s332
        %335 = dma.hbm_to_vmem [thread:$0]  %s329, 32, %s333, [#allocation3], 128, 128, 1
        %s336 = sadd.s32 %s197, 10
        %s337 = sld [smem:[#allocation5 + %s336]]
        %s338 = sshrl.u32 %s337, 3
        %s339 = sand.u32 %s337, 7
        %s340 = smul.u32 %s338, 16
        %s341 = sadd.s32 %s339, %s340
        %s342 = smul.addr %s341, 16
        %s343 = scalar_lea.hbm %s1, %s342
        %s344 = scalar_lea.vmem [#allocation2], 18
        %s346 = sshll.u32 %s344, 4
        %s347 = int_to_ptr.vmem [resolvable:$true] %s346
        %349 = dma.hbm_to_vmem [thread:$0]  %s343, 32, %s347, [#allocation3], 128, 128, 1
        %s350 = sadd.s32 %s197, 11
        %s351 = sld [smem:[#allocation5 + %s350]]
        %s352 = sshrl.u32 %s351, 3
        %s353 = sand.u32 %s351, 7
        %s354 = smul.u32 %s352, 16
        %s355 = sadd.s32 %s353, %s354
        %s356 = smul.addr %s355, 16
        %s357 = scalar_lea.hbm %s1, %s356
        %s358 = scalar_lea.vmem [#allocation2], 19
        %s360 = sshll.u32 %s358, 4
        %s361 = int_to_ptr.vmem [resolvable:$true] %s360
        %363 = dma.hbm_to_vmem [thread:$0]  %s357, 32, %s361, [#allocation3], 128, 128, 1
        %s364 = sadd.s32 %s197, 12
        %s365 = sld [smem:[#allocation5 + %s364]]
        %s366 = sshrl.u32 %s365, 3
        %s367 = sand.u32 %s365, 7
        %s368 = smul.u32 %s366, 16
        %s369 = sadd.s32 %s367, %s368
        %s370 = smul.addr %s369, 16
        %s371 = scalar_lea.hbm %s1, %s370
        %s372 = scalar_lea.vmem [#allocation2], 20
        %s374 = sshll.u32 %s372, 4
        %s375 = int_to_ptr.vmem [resolvable:$true] %s374
        %377 = dma.hbm_to_vmem [thread:$0]  %s371, 32, %s375, [#allocation3], 128, 128, 1
        %s378 = sadd.s32 %s197, 13
        %s379 = sld [smem:[#allocation5 + %s378]]
        %s380 = sshrl.u32 %s379, 3
        %s381 = sand.u32 %s379, 7
        %s382 = smul.u32 %s380, 16
        %s383 = sadd.s32 %s381, %s382
        %s384 = smul.addr %s383, 16
        %s385 = scalar_lea.hbm %s1, %s384
        %s386 = scalar_lea.vmem [#allocation2], 21
        %s388 = sshll.u32 %s386, 4
        %s389 = int_to_ptr.vmem [resolvable:$true] %s388
        %391 = dma.hbm_to_vmem [thread:$0]  %s385, 32, %s389, [#allocation3], 128, 128, 1
        %s392 = sadd.s32 %s197, 14
        %s393 = sld [smem:[#allocation5 + %s392]]
        %s394 = sshrl.u32 %s393, 3
        %s395 = sand.u32 %s393, 7
        %s396 = smul.u32 %s394, 16
        %s397 = sadd.s32 %s395, %s396
        %s398 = smul.addr %s397, 16
        %s399 = scalar_lea.hbm %s1, %s398
        %s400 = scalar_lea.vmem [#allocation2], 22
        %s402 = sshll.u32 %s400, 4
        %s403 = int_to_ptr.vmem [resolvable:$true] %s402
        %405 = dma.hbm_to_vmem [thread:$0]  %s399, 32, %s403, [#allocation3], 128, 128, 1
        %s406 = sadd.s32 %s197, 15
        %s407 = sld [smem:[#allocation5 + %s406]]
        %s408 = sshrl.u32 %s407, 3
        %s409 = sand.u32 %s407, 7
        %s410 = smul.u32 %s408, 16
        %s411 = sadd.s32 %s409, %s410
        %s412 = smul.addr %s411, 16
        %s413 = scalar_lea.hbm %s1, %s412
        %s414 = scalar_lea.vmem [#allocation2], 23
        %s416 = sshll.u32 %s414, 4
        %s417 = int_to_ptr.vmem [resolvable:$true] %s416
        %419 = dma.hbm_to_vmem [thread:$0]  %s413, 32, %s417, [#allocation3], 128, 128, 1
        %v420 = vld [vmem:[%s3] sm:$0x3]
        %v421 = vld [vmem:[%s4] sm:$0x3]
        loop: start=0, step=1, limit=4
        $region37: #{tpu_custom_call.1} parent=31 // loop_pre_header
          _
        $region38: #{tpu_custom_call.1} parent=31 // loop_header
          %s423 = sphi 0, %s427
          %p424 = scmp.ge.s32.totalorder %s423, 4
        $region39: #{tpu_custom_call.1} parent=31 // loop_header_branch
          %426 = sbr.rel (%p424) target = $region43
        $region40: #{tpu_custom_call.1} parent=31 // loop_body
          %s428 = sand.u32 %s423, 1
          %s429 = sadd.s32 %s423, 1
          %p430 = scmp.lt.s32.totalorder %s429, 4
          // Predicated region
          $region44: #{tpu_custom_call.1} parent=40 // pred_check
            %p431 = pneg %p430
          $region45: #{tpu_custom_call.1} parent=40 // pred_check_branch
            %433 = sbr.rel (%p431) target = $region47
          $region46: #{tpu_custom_call.1} parent=40 // pred_region
            %s434 = ssub.s32 1, %s428
            %s435 = smul.u32 %s429, 16
            %s436 = sadd.s32 %s197, %s435
            %s437 = sld [smem:[#allocation5 + %s436]]
            %s438 = sshrl.u32 %s437, 3
            %s439 = sand.u32 %s437, 7
            %s440 = smul.u32 %s438, 16
            %s441 = sadd.s32 %s439, %s440
            %s442 = smul.addr %s441, 16
            %s443 = scalar_lea.hbm %s1, %s442
            %s444 = smul.u32 %s434, 32
            %s445 = scalar_lea.vmem [#allocation2], %s444
            %s446 = scalar_lea.sflag [#allocation3], %s434
            %s448 = sshll.u32 %s445, 4
            %s449 = int_to_ptr.vmem [resolvable:$true] %s448
            %451 = dma.hbm_to_vmem [thread:$0]  %s443, 32, %s449, %s446, 128, 128, 1
            %s452 = sadd.s32 %s436, 1
            %s453 = sld [smem:[#allocation5 + %s452]]
            %s454 = sshrl.u32 %s453, 3
            %s455 = sand.u32 %s453, 7
            %s456 = smul.u32 %s454, 16
            %s457 = sadd.s32 %s455, %s456
            %s458 = smul.addr %s457, 16
            %s459 = scalar_lea.hbm %s1, %s458
            %s460 = sadd.s32 1, %s444
            %s461 = scalar_lea.vmem [#allocation2], %s460
            %s463 = sshll.u32 %s461, 4
            %s464 = int_to_ptr.vmem [resolvable:$true] %s463
            %466 = dma.hbm_to_vmem [thread:$0]  %s459, 32, %s464, %s446, 128, 128, 1
            %s467 = sadd.s32 %s436, 2
            %s468 = sld [smem:[#allocation5 + %s467]]
            %s469 = sshrl.u32 %s468, 3
            %s470 = sand.u32 %s468, 7
            %s471 = smul.u32 %s469, 16
            %s472 = sadd.s32 %s470, %s471
            %s473 = smul.addr %s472, 16
            %s474 = scalar_lea.hbm %s1, %s473
            %s475 = sadd.s32 2, %s444
            %s476 = scalar_lea.vmem [#allocation2], %s475
            %s478 = sshll.u32 %s476, 4
            %s479 = int_to_ptr.vmem [resolvable:$true] %s478
            %481 = dma.hbm_to_vmem [thread:$0]  %s474, 32, %s479, %s446, 128, 128, 1
            %s482 = sadd.s32 %s436, 3
            %s483 = sld [smem:[#allocation5 + %s482]]
            %s484 = sshrl.u32 %s483, 3
            %s485 = sand.u32 %s483, 7
            %s486 = smul.u32 %s484, 16
            %s487 = sadd.s32 %s485, %s486
            %s488 = smul.addr %s487, 16
            %s489 = scalar_lea.hbm %s1, %s488
            %s490 = sadd.s32 3, %s444
            %s491 = scalar_lea.vmem [#allocation2], %s490
            %s493 = sshll.u32 %s491, 4
            %s494 = int_to_ptr.vmem [resolvable:$true] %s493
            %496 = dma.hbm_to_vmem [thread:$0]  %s489, 32, %s494, %s446, 128, 128, 1
            %s497 = sadd.s32 %s436, 4
            %s498 = sld [smem:[#allocation5 + %s497]]
            %s499 = sshrl.u32 %s498, 3
            %s500 = sand.u32 %s498, 7
            %s501 = smul.u32 %s499, 16
            %s502 = sadd.s32 %s500, %s501
            %s503 = smul.addr %s502, 16
            %s504 = scalar_lea.hbm %s1, %s503
            %s505 = sadd.s32 4, %s444
            %s506 = scalar_lea.vmem [#allocation2], %s505
            %s508 = sshll.u32 %s506, 4
            %s509 = int_to_ptr.vmem [resolvable:$true] %s508
            %511 = dma.hbm_to_vmem [thread:$0]  %s504, 32, %s509, %s446, 128, 128, 1
            %s512 = sadd.s32 %s436, 5
            %s513 = sld [smem:[#allocation5 + %s512]]
            %s514 = sshrl.u32 %s513, 3
            %s515 = sand.u32 %s513, 7
            %s516 = smul.u32 %s514, 16
            %s517 = sadd.s32 %s515, %s516
            %s518 = smul.addr %s517, 16
            %s519 = scalar_lea.hbm %s1, %s518
            %s520 = sadd.s32 5, %s444
            %s521 = scalar_lea.vmem [#allocation2], %s520
            %s523 = sshll.u32 %s521, 4
            %s524 = int_to_ptr.vmem [resolvable:$true] %s523
            %526 = dma.hbm_to_vmem [thread:$0]  %s519, 32, %s524, %s446, 128, 128, 1
            %s527 = sadd.s32 %s436, 6
            %s528 = sld [smem:[#allocation5 + %s527]]
            %s529 = sshrl.u32 %s528, 3
            %s530 = sand.u32 %s528, 7
            %s531 = smul.u32 %s529, 16
            %s532 = sadd.s32 %s530, %s531
            %s533 = smul.addr %s532, 16
            %s534 = scalar_lea.hbm %s1, %s533
            %s535 = sadd.s32 6, %s444
            %s536 = scalar_lea.vmem [#allocation2], %s535
            %s538 = sshll.u32 %s536, 4
            %s539 = int_to_ptr.vmem [resolvable:$true] %s538
            %541 = dma.hbm_to_vmem [thread:$0]  %s534, 32, %s539, %s446, 128, 128, 1
            %s542 = sadd.s32 %s436, 7
            %s543 = sld [smem:[#allocation5 + %s542]]
            %s544 = sshrl.u32 %s543, 3
            %s545 = sand.u32 %s543, 7
            %s546 = smul.u32 %s544, 16
            %s547 = sadd.s32 %s545, %s546
            %s548 = smul.addr %s547, 16
            %s549 = scalar_lea.hbm %s1, %s548
            %s550 = sadd.s32 7, %s444
            %s551 = scalar_lea.vmem [#allocation2], %s550
            %s553 = sshll.u32 %s551, 4
            %s554 = int_to_ptr.vmem [resolvable:$true] %s553
            %556 = dma.hbm_to_vmem [thread:$0]  %s549, 32, %s554, %s446, 128, 128, 1
            %s557 = sadd.s32 %s436, 8
            %s558 = sld [smem:[#allocation5 + %s557]]
            %s559 = sshrl.u32 %s558, 3
            %s560 = sand.u32 %s558, 7
            %s561 = smul.u32 %s559, 16
            %s562 = sadd.s32 %s560, %s561
            %s563 = smul.addr %s562, 16
            %s564 = scalar_lea.hbm %s1, %s563
            %s565 = sadd.s32 16, %s444
            %s566 = scalar_lea.vmem [#allocation2], %s565
            %s568 = sshll.u32 %s566, 4
            %s569 = int_to_ptr.vmem [resolvable:$true] %s568
            %571 = dma.hbm_to_vmem [thread:$0]  %s564, 32, %s569, %s446, 128, 128, 1
            %s572 = sadd.s32 %s436, 9
            %s573 = sld [smem:[#allocation5 + %s572]]
            %s574 = sshrl.u32 %s573, 3
            %s575 = sand.u32 %s573, 7
            %s576 = smul.u32 %s574, 16
            %s577 = sadd.s32 %s575, %s576
            %s578 = smul.addr %s577, 16
            %s579 = scalar_lea.hbm %s1, %s578
            %s580 = sadd.s32 17, %s444
            %s581 = scalar_lea.vmem [#allocation2], %s580
            %s583 = sshll.u32 %s581, 4
            %s584 = int_to_ptr.vmem [resolvable:$true] %s583
            %586 = dma.hbm_to_vmem [thread:$0]  %s579, 32, %s584, %s446, 128, 128, 1
            %s587 = sadd.s32 %s436, 10
            %s588 = sld [smem:[#allocation5 + %s587]]
            %s589 = sshrl.u32 %s588, 3
            %s590 = sand.u32 %s588, 7
            %s591 = smul.u32 %s589, 16
            %s592 = sadd.s32 %s590, %s591
            %s593 = smul.addr %s592, 16
            %s594 = scalar_lea.hbm %s1, %s593
            %s595 = sadd.s32 18, %s444
            %s596 = scalar_lea.vmem [#allocation2], %s595
            %s598 = sshll.u32 %s596, 4
            %s599 = int_to_ptr.vmem [resolvable:$true] %s598
            %601 = dma.hbm_to_vmem [thread:$0]  %s594, 32, %s599, %s446, 128, 128, 1
            %s602 = sadd.s32 %s436, 11
            %s603 = sld [smem:[#allocation5 + %s602]]
            %s604 = sshrl.u32 %s603, 3
            %s605 = sand.u32 %s603, 7
            %s606 = smul.u32 %s604, 16
            %s607 = sadd.s32 %s605, %s606
            %s608 = smul.addr %s607, 16
            %s609 = scalar_lea.hbm %s1, %s608
            %s610 = sadd.s32 19, %s444
            %s611 = scalar_lea.vmem [#allocation2], %s610
            %s613 = sshll.u32 %s611, 4
            %s614 = int_to_ptr.vmem [resolvable:$true] %s613
            %616 = dma.hbm_to_vmem [thread:$0]  %s609, 32, %s614, %s446, 128, 128, 1
            %s617 = sadd.s32 %s436, 12
            %s618 = sld [smem:[#allocation5 + %s617]]
            %s619 = sshrl.u32 %s618, 3
            %s620 = sand.u32 %s618, 7
            %s621 = smul.u32 %s619, 16
            %s622 = sadd.s32 %s620, %s621
            %s623 = smul.addr %s622, 16
            %s624 = scalar_lea.hbm %s1, %s623
            %s625 = sadd.s32 20, %s444
            %s626 = scalar_lea.vmem [#allocation2], %s625
            %s628 = sshll.u32 %s626, 4
            %s629 = int_to_ptr.vmem [resolvable:$true] %s628
            %631 = dma.hbm_to_vmem [thread:$0]  %s624, 32, %s629, %s446, 128, 128, 1
            %s632 = sadd.s32 %s436, 13
            %s633 = sld [smem:[#allocation5 + %s632]]
            %s634 = sshrl.u32 %s633, 3
            %s635 = sand.u32 %s633, 7
            %s636 = smul.u32 %s634, 16
            %s637 = sadd.s32 %s635, %s636
            %s638 = smul.addr %s637, 16
            %s639 = scalar_lea.hbm %s1, %s638
            %s640 = sadd.s32 21, %s444
            %s641 = scalar_lea.vmem [#allocation2], %s640
            %s643 = sshll.u32 %s641, 4
            %s644 = int_to_ptr.vmem [resolvable:$true] %s643
            %646 = dma.hbm_to_vmem [thread:$0]  %s639, 32, %s644, %s446, 128, 128, 1
            %s647 = sadd.s32 %s436, 14
            %s648 = sld [smem:[#allocation5 + %s647]]
            %s649 = sshrl.u32 %s648, 3
            %s650 = sand.u32 %s648, 7
            %s651 = smul.u32 %s649, 16
            %s652 = sadd.s32 %s650, %s651
            %s653 = smul.addr %s652, 16
            %s654 = scalar_lea.hbm %s1, %s653
            %s655 = sadd.s32 22, %s444
            %s656 = scalar_lea.vmem [#allocation2], %s655
            %s658 = sshll.u32 %s656, 4
            %s659 = int_to_ptr.vmem [resolvable:$true] %s658
            %661 = dma.hbm_to_vmem [thread:$0]  %s654, 32, %s659, %s446, 128, 128, 1
            %s662 = sadd.s32 %s436, 15
            %s663 = sld [smem:[#allocation5 + %s662]]
            %s664 = sshrl.u32 %s663, 3
            %s665 = sand.u32 %s663, 7
            %s666 = smul.u32 %s664, 16
            %s667 = sadd.s32 %s665, %s666
            %s668 = smul.addr %s667, 16
            %s669 = scalar_lea.hbm %s1, %s668
            %s670 = sadd.s32 23, %s444
            %s671 = scalar_lea.vmem [#allocation2], %s670
            %s673 = sshll.u32 %s671, 4
            %s674 = int_to_ptr.vmem [resolvable:$true] %s673
            %676 = dma.hbm_to_vmem [thread:$0]  %s669, 32, %s674, %s446, 128, 128, 1
          $region47: #{tpu_custom_call.1} parent=40 // pred_fallthru
            _
          %s677 = scalar_lea.sflag [#allocation3], %s428
          %s678 = smul.u32 1, 2
          %s679 = sshll.u32 %s678, 4
          %680 = dma.done %s677, %s679
          %s681 = sshll.u32 %s678, 4
          %682 = dma.done %s677, %s681
          %s683 = sshll.u32 %s678, 4
          %684 = dma.done %s677, %s683
          %s685 = sshll.u32 %s678, 4
          %686 = dma.done %s677, %s685
          %s687 = sshll.u32 %s678, 4
          %688 = dma.done %s677, %s687
          %s689 = sshll.u32 %s678, 4
          %690 = dma.done %s677, %s689
          %s691 = sshll.u32 %s678, 4
          %692 = dma.done %s677, %s691
          %s693 = sshll.u32 %s678, 4
          %694 = dma.done %s677, %s693
          %s695 = sshll.u32 %s678, 4
          %696 = dma.done %s677, %s695
          %s697 = sshll.u32 %s678, 4
          %698 = dma.done %s677, %s697
          %s699 = sshll.u32 %s678, 4
          %700 = dma.done %s677, %s699
          %s701 = sshll.u32 %s678, 4
          %702 = dma.done %s677, %s701
          %s703 = sshll.u32 %s678, 4
          %704 = dma.done %s677, %s703
          %s705 = sshll.u32 %s678, 4
          %706 = dma.done %s677, %s705
          %s707 = sshll.u32 %s678, 4
          %708 = dma.done %s677, %s707
          %s709 = sshll.u32 %s678, 4
          %710 = dma.done %s677, %s709
          %s711 = smul.u32 %s423, 16
          %s712 = smul.u32 %s428, 4
          %s713 = smul.addr %s712, 8
          %s714 = scalar_lea.vmem [#allocation2], %s713
          %v715 = vld [vmem:[%s714] sm:$0xff]
          %v716 = vld [vmem:[%s714 + $0x8] sm:$0xff]
          %v717 = vld [vmem:[%s714 + $0x10] sm:$0xff]
          %v718 = vld [vmem:[%s714 + $0x18] sm:$0xff]
          %s719 = sshra.s32 %s711, 3
          %s720 = sand.u32 %s711, 7
          %s721 = smul.u32 %s719, 2
          %s722 = smul.addr %s721, 8
          %s723 = scalar_lea.vmem [#allocation6], %s722
          %v724 = vld [vmem:[%s723] sm:$0xff]
          %v725 = vld [vmem:[%s723 + $0x8] sm:$0xff]
          %v726 = vld [vmem:[%s723 + $0x10] sm:$0xff]
          %v727 = vld [vmem:[%s723 + $0x18] sm:$0xff]
          %v728 = vadd.f32 %v715, %v724
          %v729 = vadd.f32 %v716, %v725
          %v730 = vadd.f32 %v717, %v726
          %v731 = vadd.f32 %v718, %v727
          %v732 = vadd.f32 %v728, %v729
          %733 = vadd.xlane.f32.xlu0 %v732
          %v734 = vpop.xlane.xlu0 %733
          %v735 = vadd.f32 %v730, %v731
          %736 = vadd.xlane.f32.xlu0 %v735
          %v737 = vpop.xlane.xlu0 %736
          %v738 = vrcp.pop 256.0
          %v739 = vmul.f32 %v734, %v738
          %v740 = vmul.f32 %v737, %v738
          %v741 = vsub.f32 %v728, %v739
          %v742 = vsub.f32 %v729, %v739
          %v743 = vsub.f32 %v730, %v740
          %v744 = vsub.f32 %v731, %v740
          %v745 = vmul.f32 %v741, %v741
          %v746 = vmul.f32 %v742, %v742
          %v747 = vmul.f32 %v743, %v743
          %v748 = vmul.f32 %v744, %v744
          %v749 = vadd.f32 %v745, %v746
          %750 = vadd.xlane.f32.xlu0 %v749
          %v751 = vpop.xlane.xlu0 %750
          %v752 = vadd.f32 %v747, %v748
          %753 = vadd.xlane.f32.xlu0 %v752
          %v754 = vpop.xlane.xlu0 %753
          %v755 = vmul.f32 %v751, %v738
          %v756 = vmul.f32 %v754, %v738
          %v757 = vadd.f32 %v755, 1e-05
          %v758 = vadd.f32 %v756, 1e-05
          %v759 = vrsqrt.pop %v757
          %v760 = vrsqrt.pop %v758
          %v761 = vmul.f32 %v741, %v759
          %v762 = vmul.f32 %v742, %v759
          %v763 = vmul.f32 %v743, %v760
          %v764 = vmul.f32 %v744, %v760
          %v766 = vlaneseq
          %v767 = vshrl.u32 %v766, 7
          %v768 = vsub.s32 0, %v767
          %v769 = vrot.slane %v420, %v768
          %v770 = vlaneseq
          %v771 = vshrl.u32 %v770, 7
          %v772 = vsub.s32 1, %v771
          %v773 = vrot.slane %v420, %v772
          %v776 = vmul.f32 %v761, %v769
          %v777 = vmul.f32 %v762, %v773
          %v778 = vmul.f32 %v763, %v769
          %v779 = vmul.f32 %v764, %v773
          %v781 = vlaneseq
          %v782 = vshrl.u32 %v781, 7
          %v783 = vsub.s32 0, %v782
          %v784 = vrot.slane %v421, %v783
          %v785 = vlaneseq
          %v786 = vshrl.u32 %v785, 7
          %v787 = vsub.s32 1, %v786
          %v788 = vrot.slane %v421, %v787
          %v791 = vadd.f32 %v776, %v784
          %v792 = vadd.f32 %v777, %v788
          %v793 = vadd.f32 %v778, %v784
          %v794 = vadd.f32 %v779, %v788
          %s795 = smul.addr %s721, 8
          %s796 = scalar_lea.vmem %s192, %s795 [#allocation9]
          %797 = vst [vmem:[%s796] sm:$0xff] %v791
          %798 = vst [vmem:[%s796 + $0x8] sm:$0xff] %v792
          %799 = vst [vmem:[%s796 + $0x10] sm:$0xff] %v793
          %800 = vst [vmem:[%s796 + $0x18] sm:$0xff] %v794
        $region41: #{tpu_custom_call.1} parent=31 // loop_footer
          %s427 = sadd.s32 1, %s423
        $region42: #{tpu_custom_call.1} parent=31 // loop_footer_branch
          %422 = sbr.rel target = $region38
        $region43: #{tpu_custom_call.1} parent=31 // loop_exit
          _
        %s801 = sand.u32 %s114, 1
        %s802 = scalar_lea.sflag [#allocation8], %s801
        %s803 = sand.u32 %s114, 1
        %s804 = smul.addr %s803, 128
        %s805 = scalar_lea.vmem [#allocation9], %s804
        // Predicated region
        $region48: #{tpu_custom_call.1} parent=31 // pred_check
          %p806 = pneg %p124
        $region49: #{tpu_custom_call.1} parent=31 // pred_check_branch
          %808 = sbr.rel (%p806) target = $region51
        $region50: #{tpu_custom_call.1} parent=31 // pred_region
          %s809 = smul.u32 8, %s29
          %s811 = ssub.s32 2048, 2048
          %812 = vsyncadd %s802, %s811
          %s813 = smul.addr %s809, 2
          %s814 = smul.addr %s28, 16
          %s815 = sadd.s32 %s813, %s814
          %s816 = smul.addr %s815, 128
          %s817 = scalar_lea.hbm %s5, %s816
          %s818 = sshll.u32 %s805, 4
          %s819 = int_to_ptr.vmem [resolvable:$true] %s818
          %824 = dma.vmem_to_hbm [thread:$0]  %s819, 2048, %s817, %s802, 256, 256, 16
        $region51: #{tpu_custom_call.1} parent=31 // pred_fallthru
          _
      $region32: #{tpu_custom_call.1} parent=5 // pred_fallthru
        _
      %p825 = scmp.le.s32.totalorder 2, %s19
      // Predicated region
      $region52: #{tpu_custom_call.1} parent=5 // pred_check
        %p826 = pneg %p825
      $region53: #{tpu_custom_call.1} parent=5 // pred_check_branch
        %828 = sbr.rel (%p826) target = $region55
      $region54: #{tpu_custom_call.1} parent=5 // pred_region
        %s829 = ssub.s32 %s19, 2
        // Predicated region
        $region56: #{tpu_custom_call.1} parent=54 // pred_check
          %p830 = pneg %p130
        $region57: #{tpu_custom_call.1} parent=54 // pred_check_branch
          %832 = sbr.rel (%p830) target = $region59
        $region58: #{tpu_custom_call.1} parent=54 // pred_region
          %s833 = sand.u32 %s115, 1
          %s834 = scalar_lea.sflag [#allocation8], %s833
          %s835 = sand.u32 %s115, 1
          %s836 = smul.addr %s835, 128
          %s837 = scalar_lea.vmem [#allocation9], %s836
          %838 = dma.done %s834, 2048
        $region59: #{tpu_custom_call.1} parent=54 // pred_fallthru
          _
      $region55: #{tpu_custom_call.1} parent=5 // pred_fallthru
        _
    $region6: #{tpu_custom_call.1} parent=1 // loop_footer
      %s23 = sadd.s32 1, %s19
    $region7: #{tpu_custom_call.1} parent=1 // loop_footer_branch
      %18 = sbr.rel target = $region3
    $region8: #{tpu_custom_call.1} parent=1 // loop_exit
      _
    %839 = vsyncpa [#allocation7], 1
    %s840 = scalar_lea.sflag [#allocation7], 1
    %841 = vsyncpa %s840, 1
    %842 = vsyncpa [#allocation8], 1
    %s843 = scalar_lea.sflag [#allocation8], 1
    %844 = vsyncpa %s843, 1
  %845 = vsyncmov [#allocation3]
  %s846 = vpop.sfrf %845
  %p847 = scmp.eq.s32.totalorder %s846, 0
  %p848 = pneg %p847
  %850 = shalt.err (%p848)
  %s851 = scalar_lea.sflag [#allocation3], 1
  %852 = vsyncmov %s851
  %s853 = vpop.sfrf %852
  %p854 = scmp.eq.s32.totalorder %s853, 0
  %p855 = pneg %p854
  %857 = shalt.err (%p855)

</llo_original>
